<compile_context>
chip_gen: v7x
topology: tpu7x:2x2x1
jax: 0.10.0
libtpu: 0.0.40
codegen_flags: <defaults>
</compile_context>

<pallas_src>
import functools
import math
import types

import jax
import jax.numpy as jnp
from jax.experimental import pallas as pl
from jax.experimental.pallas import tpu as pltpu

VMEM = pltpu.MemorySpace.VMEM
SMEM = pltpu.MemorySpace.SMEM

HEADS = 4
NUM_TRAIN_TIMESTEPS = 1000  # DDPMScheduler() defaults


# ------------------------------ layout ---------------------------------------

def make_layout(cfg):
  """Static offsets of every tensor inside the three packed slabs."""
  C = cfg["model_channels"]
  assert C % HEADS == 0
  assert 4 * C <= 128, "lane-packed layout assumes model_channels <= 32"
  Cin = cfg["n_coords"] + 2
  Cout = cfg["out_channels"] + 2
  # AU produces 9*n_coords features (== torch's n_coords + 2*8 when n_coords=2)
  n_ct = cfg["n_coords"] * 9 + cfg["max_n_vertices"] + cfg["max_n_polygons"]
  n_cd = cfg["max_n_polygons"] + 1
  n_ctcd = n_ct + n_cd

  def up(x, a):
    return ((x + a - 1) // a) * a

  lay = types.SimpleNamespace(C=C, Cin=Cin, Cout=Cout,
                              n_ct=n_ct, n_cd=n_cd, n_ctcd=n_ctcd)

  # --- data slab (f32, (B*L, d_cols)) lane offsets ---
  lay.d_tsin = 0                       # expanded timestep sinusoid, width C
  lay.d_ctcd = C                       # [corrupt feats | condition feats]
  lay.d_x0 = lay.d_ctcd + n_ctcd       # clean target, width Cin
  lay.d_nz = lay.d_x0 + Cin            # gaussian noise, width Cin
  lay.d_sa = lay.d_nz + Cin            # sqrt(alpha_cumprod[t]) column
  lay.d_sb = lay.d_sa + 1              # sqrt(1 - alpha_cumprod[t]) column
  lay.d_pad = lay.d_sb + 1             # padding-mask column
  lay.d_cols = up(lay.d_pad + 1, 128)

  # --- weight slab (bf16, 128 lanes); each segment starts on a 16-row tile ---
  lay.w_cols = 128
  off = 0
  for name, rows in (("w_mask", 4 * C), ("w_in", Cin), ("w_ctcd", n_ctcd),
                     ("w_t1", C), ("w_t2", C),
                     ("w_q1", C), ("w_kv1", C), ("w_so", 2 * C),
                     ("w_q2", C), ("w_kv2", 2 * C), ("w_od", 4 * C),
                     ("w_ff1", C), ("w_ff2", 2 * C),
                     ("w_o1", C), ("w_o2", C)):
    setattr(lay, name, off)
    off += up(rows, 16)
  lay.w_rows = off

  # --- bias / LayerNorm slab (f32, 128 lanes), one row per vector ---
  for i, name in enumerate((
      "b_in", "b_ctcd", "b_t1", "b_t2",
      "b_ln1g", "b_ln1b", "b_ln2g", "b_ln2b", "b_ln3g", "b_ln3b",
      "b_q1", "b_kv1", "b_so", "b_q2", "b_kv2", "b_od",
      "b_ff1", "b_ff2", "b_o1", "b_o2")):
    setattr(lay, name, i)
  lay.b_rows = up(20, 8)
  return lay


# ------------------------------ fused kernel ---------------------------------

def _fused_forward_kernel(data_ref, w_ref, b_ref, loss_ref, *, lay, B, L,
                          inv_denom):
  C, Cin, Cout, n_ctcd = lay.C, lay.Cin, lay.Cout, lay.n_ctcd

  def wseg(off, k, n):                      # bf16 (k, n) weight tile
    return w_ref[off:off + k, :n]

  def brow(row, n):                         # f32 (1, n) bias / LN row
    return b_ref[row:row + 1, :n]

  def mm(a, w):
    # bf16 MXU operands, f32 accumulation; elementwise math stays f32.
    return jnp.dot(a.astype(jnp.bfloat16), w, preferred_element_type=jnp.float32)

  def layernorm(x, g_row, b_row):
    mu = jnp.mean(x, axis=-1, keepdims=True)
    xc = x - mu
    var = jnp.mean(xc * xc, axis=-1, keepdims=True)
    return xc * jax.lax.rsqrt(var + 1e-5) * brow(g_row, C) + brow(b_row, C)

  def attn(qarr, kvarr, mask):
    # torch nn.MultiheadAttention on (S=B, N=L, E=C): the sequence axis is B.
    # qarr has the scaled queries on the K lanes of kvarr (zeros elsewhere);
    # mask maps head-summed scores onto the V lanes, so a single batched GEMM
    # over all B*B (i, j) pairs produces every score, and the weighted-V sum
    # is pure elementwise work.  Junk lanes are annihilated later by zero rows
    # of the output-projection weight.
    prods = []
    for i in range(B):
      qi = qarr[i * L:(i + 1) * L, :]
      for j in range(B):
        prods.append(qi * kvarr[j * L:(j + 1) * L, :])
    scores = mm(jnp.concatenate(prods, axis=0), mask)     # (B*B*L, W), 1 GEMM
    ctxs = []
    for i in range(B):
      s = [scores[(i * B + j) * L:(i * B + j + 1) * L, :] for j in range(B)]
      m = s[0]
      for j in range(1, B):
        m = jnp.maximum(m, s[j])
      e = [jnp.exp(sj - m) for sj in s]
      den = e[0]
      for j in range(1, B):
        den = den + e[j]
      inv = pl.reciprocal(den, approx=True)               # EUP, frees VALU slot
      ctx = (e[0] * inv) * kvarr[0:L, :]
      for j in range(1, B):
        ctx = ctx + (e[j] * inv) * kvarr[j * L:(j + 1) * L, :]
      ctxs.append(ctx)
    return jnp.concatenate(ctxs, axis=0)                  # (B*L, W)

  d = data_ref[...]                                       # (B*L, d_cols) f32
  x0 = d[:, lay.d_x0:lay.d_x0 + Cin]
  nz = d[:, lay.d_nz:lay.d_nz + Cin]
  sa = d[:, lay.d_sa:lay.d_sa + 1]
  sb = d[:, lay.d_sb:lay.d_sb + 1]
  pad = d[:, lay.d_pad:lay.d_pad + 1]

  # ---- DDPM add-noise (one fused VPU op) + input embedding ----
  x_t = sa * x0 + sb * nz
  shift_emb = mm(x_t, wseg(lay.w_in, Cin, C)) + brow(lay.b_in, C)

  # ---- corrupt & condition embeddings, lane-concatenated: [cor_emb|cond_emb]
  cc_emb = (mm(d[:, lay.d_ctcd:lay.d_ctcd + n_ctcd],
               wseg(lay.w_ctcd, n_ctcd, 2 * C)) + brow(lay.b_ctcd, 2 * C))

  # ---- timestep MLP: Linear -> SiLU -> Linear (sinusoid pre-expanded) ----
  te = mm(d[:, lay.d_tsin:lay.d_tsin + C], wseg(lay.w_t1, C, C)) + brow(lay.b_t1, C)
  te = te * jax.nn.sigmoid(te)
  te = mm(te, wseg(lay.w_t2, C, C)) + brow(lay.b_t2, C)

  # Every encoder layer in the reference re-consumes shift_emb + time_emb
  # (`out = layer(shift_emb + time_emb, ...)`), so only the LAST layer reaches
  # the output head; earlier layers are dead compute and are not evaluated.
  # TODO(synk): nn.Dropout(0.1)/attention dropout in training mode is
  # stochastic; eval-mode identity is used here.
  x = shift_emb + te

  mask64 = w_ref[lay.w_mask:lay.w_mask + 2 * C, :2 * C]
  mask128 = w_ref[lay.w_mask:lay.w_mask + 4 * C, :4 * C]

  # ---- block 1: self-attention (q already scaled; kv = [k|v]) ----
  z = layernorm(x, lay.b_ln1g, lay.b_ln1b)
  q1 = mm(z, wseg(lay.w_q1, C, 2 * C)) + brow(lay.b_q1, 2 * C)       # [q*s | 0]
  kv1 = mm(z, wseg(lay.w_kv1, C, 2 * C)) + brow(lay.b_kv1, 2 * C)    # [k | v]
  ctx1 = attn(q1, kv1, mask64)                                       # [. | ctx]
  x = x + mm(ctx1, wseg(lay.w_so, 2 * C, C)) + brow(lay.b_so, C)

  # ---- block 2: corrupt + condition cross-attention, fully lane-fused ----
  z = layernorm(x, lay.b_ln2g, lay.b_ln2b)
  q2 = mm(z, wseg(lay.w_q2, C, 4 * C)) + brow(lay.b_q2, 4 * C)       # [qc*s|0|qd*s|0]
  kv2 = mm(cc_emb, wseg(lay.w_kv2, 2 * C, 4 * C)) + brow(lay.b_kv2, 4 * C)  # [kc|vc|kd|vd]
  ctx2 = attn(q2, kv2, mask128)                                      # [.|ctx_c|.|ctx_d]
  x = x + mm(ctx2, wseg(lay.w_od, 4 * C, C)) + brow(lay.b_od, C)

  # ---- block 3: feed-forward ----
  z = layernorm(x, lay.b_ln3g, lay.b_ln3b)
  h = jnp.maximum(mm(z, wseg(lay.w_ff1, C, 2 * C)) + brow(lay.b_ff1, 2 * C), 0.0)
  x = x + mm(h, wseg(lay.w_ff2, 2 * C, C)) + brow(lay.b_ff2, C)

  # ---- output head + masked-MSE loss (single SMEM scalar output) ----
  o = jnp.maximum(mm(x, wseg(lay.w_o1, C, C)) + brow(lay.b_o1, C), 0.0)
  o = mm(o, wseg(lay.w_o2, C, Cout)) + brow(lay.b_o2, Cout)          # (B*L, Cout)
  diff = (nz - o) * pad
  loss_ref[0, 0] = jnp.sum(diff * diff) * inv_denom


# ------------------------------ JAX glue -------------------------------------

def AU(points, edges):
  B, L, nc = points.shape
  idx = edges[:, :, 1].astype(jnp.int32)
  p1 = points.reshape(B, L, 2, -1)
  p5 = jnp.take_along_axis(
      points, jnp.broadcast_to(idx[:, :, None], points.shape), axis=1
  ).reshape(B, L, 2, -1)
  p3 = (p1 + p5) / 2
  p2 = (p1 + p3) / 2
  p4 = (p3 + p5) / 2
  p1_5 = (p1 + p2) / 2
  p2_5 = (p2 + p3) / 2
  p3_5 = (p3 + p4) / 2
  p4_5 = (p4 + p5) / 2
  parts = [p1, p1_5, p2, p2_5, p3, p3_5, p4, p4_5, p5]
  return jnp.concatenate([q.reshape(B, L, nc) for q in parts], axis=2)


def timestep_embedding(t, dim, max_period=10000.0):
  half = dim // 2
  freqs = jnp.exp(-math.log(max_period)
                  * jnp.arange(half, dtype=jnp.float32) / half)
  args = t[:, None].astype(jnp.float32) * freqs[None]
  return jnp.concatenate([jnp.cos(args), jnp.sin(args)], axis=-1)


def diffusion_forward(packed, model_kwargs, key, cfg):
  lay = make_layout(cfg)
  x0 = model_kwargs["shift"]
  B, L, Cin = x0.shape
  M = B * L
  C, Cout = lay.C, lay.Cout
  assert Cin == lay.Cin and Cin == Cout
  assert cfg["num_layers"] >= 1

  kt, kn = jax.random.split(key)
  # TODO(synk): torch RNG (randint / randn_like) cannot be bit-matched; jax.random used.
  t = jax.random.randint(kt, (B,), 0, NUM_TRAIN_TIMESTEPS)
  noise = jax.random.normal(kn, x0.shape, dtype=jnp.float32)

  # DDPMScheduler() defaults: linear betas 1e-4 .. 0.02, 1000 train steps.
  betas = jnp.linspace(1e-4, 0.02, NUM_TRAIN_TIMESTEPS, dtype=jnp.float32)
  ac = jnp.cumprod(1.0 - betas)
  sa = jnp.sqrt(ac)[t]
  sb = jnp.sqrt(1.0 - ac)[t]

  # Tiny data-dependent glue: edge gather, host-side sigmoids, sinusoid table.
  au = AU(model_kwargs["corrupt"].astype(jnp.float32), model_kwargs["edges"])
  ct_feat = jnp.concatenate(
      [au,
       jax.nn.sigmoid(model_kwargs["vertice_inds"].astype(jnp.float32)),
       jax.nn.sigmoid(model_kwargs["polygon_inds"].astype(jnp.float32))], axis=2)
  cond_feat = jnp.concatenate(
      [jax.nn.sigmoid(model_kwargs["graph"].astype(jnp.float32)),
       model_kwargs["area"].astype(jnp.float32)], axis=2)
  t_sin = timestep_embedding(t, C)

  def col(v):                                    # (B,) -> (B*L, 1)
    return jnp.broadcast_to(v[:, None], (B, L)).reshape(M, 1)

  slab = jnp.concatenate([
      jnp.broadcast_to(t_sin[:, None, :], (B, L, C)).reshape(M, C),
      ct_feat.reshape(M, -1),
      cond_feat.reshape(M, -1),
      x0.reshape(M, Cin).astype(jnp.float32),
      noise.reshape(M, Cin),
      col(sa), col(sb),
      model_kwargs["padding_mask"].reshape(M, 1).astype(jnp.float32),
  ], axis=1)
  slab = jnp.pad(slab, ((0, 0), (0, lay.d_cols - slab.shape[1])))

  kernel = functools.partial(_fused_forward_kernel, lay=lay, B=B, L=L,
                             inv_denom=1.0 / float(M * Cout))
  # Exactly 3 HBM->VMEM entry DMAs (data / bf16 weight / f32 bias slabs); the
  # only output is a (1,1) scalar loss in SMEM (no lane-masked vector stores).
  # TODO(synk): on v7x, batch several diffusion samples per call before using
  # the second TensorCore; at B*L=16 a single core is the win.
  loss = pl.pallas_call(
      kernel,
      out_shape=jax.ShapeDtypeStruct((1, 1), jnp.float32),
      in_specs=[pl.BlockSpec(memory_space=VMEM)] * 3,
      out_specs=pl.BlockSpec(memory_space=SMEM),
  )(slab, packed["w"], packed["b"])
  return {"loss": loss[0, 0]}


# ------------------------------ parameters -----------------------------------

def init_params(key, cfg):
  C = cfg["model_channels"]
  nc = cfg["n_coords"]
  keys = iter(jax.random.split(key, 256))

  def w(shape, scale=0.02):
    return jax.random.normal(next(keys), shape, jnp.float32) * scale

  def b(n):
    return jnp.zeros((n,), jnp.float32)

  def mha_p():
    # TODO(synk): nn.MultiheadAttention packs q/k/v into one in_proj weight;
    # separate wq/wk/wv are structurally equivalent but won't bit-match a
    # torch checkpoint without repacking.
    return dict(wq=w((C, C)), bq=b(C), wk=w((C, C)), bk=b(C),
                wv=w((C, C)), bv=b(C), wo=w((C, C)), bo=b(C))

  corrupt_in = nc * 9 + cfg["max_n_vertices"] + cfg["max_n_polygons"]
  return dict(
      input_w=w((nc + 2, C)), input_b=b(C),
      corrupt_w=w((corrupt_in, C)), corrupt_b=b(C),
      cond_w=w((cfg["max_n_polygons"] + 1, C)), cond_b=b(C),
      time_w1=w((C, C)), time_b1=b(C),
      time_w2=w((C, C)), time_b2=b(C),
      layers=[dict(
          ln1_g=jnp.ones((C,), jnp.float32), ln1_b=jnp.zeros((C,), jnp.float32),
          ln2_g=jnp.ones((C,), jnp.float32), ln2_b=jnp.zeros((C,), jnp.float32),
          ln3_g=jnp.ones((C,), jnp.float32), ln3_b=jnp.zeros((C,), jnp.float32),
          self_attn=mha_p(), corrupt_attn=mha_p(), cond_attn=mha_p(),
          ff_w1=w((C, 2 * C)), ff_b1=b(2 * C),
          ff_w2=w((2 * C, C)), ff_b2=b(C),
      ) for _ in range(cfg["num_layers"])],
      out1_w=w((C, C)), out1_b=b(C),
      out2_w=w((C, cfg["out_channels"] + 2)), out2_b=b(cfg["out_channels"] + 2),
  )


def pack_params(params, cfg):
  """Pack ALL weights into one bf16 slab and all biases/LN into one f32 slab.

  Only the last encoder layer's weights are packed (the reference loop feeds
  shift_emb + time_emb to every layer, so earlier layers never reach the
  output).  The 1/sqrt(head_dim) query scale is folded into Wq/bq, the
  corrupt/cond K-V projections are block-diagonal lane-fused, and the
  output-projection weights get zero rows that kill the junk context lanes.
  """
  lay = make_layout(cfg)
  C = lay.C
  hd = C // HEADS
  s = 1.0 / math.sqrt(hd)
  lp = params["layers"][-1]

  w = jnp.zeros((lay.w_rows, lay.w_cols), jnp.float32)
  b = jnp.zeros((lay.b_rows, lay.w_cols), jnp.float32)

  def put(slab, r, c, arr):
    arr = jnp.asarray(arr, jnp.float32)
    return slab.at[r:r + arr.shape[0], c:c + arr.shape[1]].set(arr)

  def put_row(slab, r, c, vec):
    vec = jnp.asarray(vec, jnp.float32)
    return slab.at[r, c:c + vec.shape[0]].set(vec)

  # Block-diagonal per-head score mask, offset so head-summed scores land on
  # the V lanes of the fused [k|v] / [kc|vc|kd|vd] arrays.
  head_id = jnp.arange(C) // hd
  blk = (head_id[:, None] == head_id[None, :]).astype(jnp.float32)
  w = put(w, lay.w_mask, C, blk)                 # in-lanes [0,C)   -> out [C,2C)
  w = put(w, lay.w_mask + 2 * C, 3 * C, blk)     # in-lanes [2C,3C) -> out [3C,4C)

  # feature / timestep embeddings
  w = put(w, lay.w_in, 0, params["input_w"])
  w = put(w, lay.w_ctcd, 0, params["corrupt_w"])
  w = put(w, lay.w_ctcd + lay.n_ct, C, params["cond_w"])
  w = put(w, lay.w_t1, 0, params["time_w1"])
  w = put(w, lay.w_t2, 0, params["time_w2"])

  p_self, p_cor, p_cond = lp["self_attn"], lp["corrupt_attn"], lp["cond_attn"]

  # self-attention
  w = put(w, lay.w_q1, 0, p_self["wq"] * s)
  w = put(w, lay.w_kv1, 0, p_self["wk"])
  w = put(w, lay.w_kv1, C, p_self["wv"])
  w = put(w, lay.w_so + C, 0, p_self["wo"])      # rows [0,C) stay zero

  # corrupt + condition cross-attention, lane-fused to 4C lanes
  w = put(w, lay.w_q2, 0, p_cor["wq"] * s)
  w = put(w, lay.w_q2, 2 * C, p_cond["wq"] * s)
  w = put(w, lay.w_kv2, 0, p_cor["wk"])
  w = put(w, lay.w_kv2, C, p_cor["wv"])
  w = put(w, lay.w_kv2 + C, 2 * C, p_cond["wk"])
  w = put(w, lay.w_kv2 + C, 3 * C, p_cond["wv"])
  w = put(w, lay.w_od + C, 0, p_cor["wo"])       # rows [0,C) / [2C,3C) stay zero
  w = put(w, lay.w_od + 3 * C, 0, p_cond["wo"])

  w = put(w, lay.w_ff1, 0, lp["ff_w1"])
  w = put(w, lay.w_ff2, 0, lp["ff_w2"])
  w = put(w, lay.w_o1, 0, params["out1_w"])
  w = put(w, lay.w_o2, 0, params["out2_w"])

  # biases / LayerNorm
  b = put_row(b, lay.b_in, 0, params["input_b"])
  b = put_row(b, lay.b_ctcd, 0, params["corrupt_b"])
  b = put_row(b, lay.b_ctcd, C, params["cond_b"])
  b = put_row(b, lay.b_t1, 0, params["time_b1"])
  b = put_row(b, lay.b_t2, 0, params["time_b2"])
  b = put_row(b, lay.b_ln1g, 0, lp["ln1_g"])
  b = put_row(b, lay.b_ln1b, 0, lp["ln1_b"])
  b = put_row(b, lay.b_ln2g, 0, lp["ln2_g"])
  b = put_row(b, lay.b_ln2b, 0, lp["ln2_b"])
  b = put_row(b, lay.b_ln3g, 0, lp["ln3_g"])
  b = put_row(b, lay.b_ln3b, 0, lp["ln3_b"])
  b = put_row(b, lay.b_q1, 0, p_self["bq"] * s)
  b = put_row(b, lay.b_kv1, 0, p_self["bk"])
  b = put_row(b, lay.b_kv1, C, p_self["bv"])
  b = put_row(b, lay.b_so, 0, p_self["bo"])
  b = put_row(b, lay.b_q2, 0, p_cor["bq"] * s)
  b = put_row(b, lay.b_q2, 2 * C, p_cond["bq"] * s)
  b = put_row(b, lay.b_kv2, 0, p_cor["bk"])
  b = put_row(b, lay.b_kv2, C, p_cor["bv"])
  b = put_row(b, lay.b_kv2, 2 * C, p_cond["bk"])
  b = put_row(b, lay.b_kv2, 3 * C, p_cond["bv"])
  b = put_row(b, lay.b_od, 0, p_cor["bo"] + p_cond["bo"])
  b = put_row(b, lay.b_ff1, 0, lp["ff_b1"])
  b = put_row(b, lay.b_ff2, 0, lp["ff_b2"])
  b = put_row(b, lay.b_o1, 0, params["out1_b"])
  b = put_row(b, lay.b_o2, 0, params["out2_b"])

  return dict(w=w.astype(jnp.bfloat16), b=b)


# --------------------------------- main ---------------------------------------

if __name__ == "__main__":
  cfg = dict(n_coords=2, max_n_polygons=4, max_n_vertices=8,
             model_channels=32, out_channels=2, num_layers=2)
  B, L = 2, 8

  key = jax.random.PRNGKey(0)
  kp, kd, kf = jax.random.split(key, 3)
  params = init_params(kp, cfg)
  packed = pack_params(params, cfg)

  ks = jax.random.split(kd, 8)
  model_kwargs = {
      "shift": jax.random.normal(ks[0], (B, L, cfg["n_coords"] + 2), jnp.float32),
      "corrupt": jax.random.normal(ks[1], (B, L, cfg["n_coords"]), jnp.float32),
      "edges": jax.random.randint(ks[2], (B, L, 2), 0, L).astype(jnp.int32),
      "vertice_inds": jax.random.normal(ks[3], (B, L, cfg["max_n_vertices"]), jnp.float32),
      "polygon_inds": jax.random.normal(ks[4], (B, L, cfg["max_n_polygons"]), jnp.float32),
      "graph": jax.random.normal(ks[5], (B, L, cfg["max_n_polygons"]), jnp.float32),
      "area": jax.random.normal(ks[6], (B, L, 1), jnp.float32),
      "padding_mask": (jax.random.uniform(ks[7], (B, L)) > 0.2).astype(jnp.float32),
  }

  fwd = jax.jit(lambda pk, kw, k: diffusion_forward(pk, kw, k, cfg))
  out = fwd(packed, model_kwargs, kf)
  loss = jax.block_until_ready(out["loss"])
  assert bool(jnp.isfinite(loss))
  print("KERNEL_OK")
</pallas_src>

<mosaic_0001>
module attributes {stable_mosaic.version = 11 : i64} {
  func.func @_fused_forward_kernel(%arg0: memref<16x128xf32, #tpu.memory_space<vmem>>, %arg1: memref<768x128xbf16, #tpu.memory_space<vmem>>, %arg2: memref<24x128xf32, #tpu.memory_space<vmem>>, %arg3: memref<1x1xf32, #tpu.memory_space<smem>>) attributes {dimension_semantics = [], scalar_prefetch = 0 : i64, scratch_operands = 0 : i64, tpu.core_type = #tpu.core_type<tc>} {
    %c0 = arith.constant 0 : index
    %c0_0 = arith.constant 0 : index
    %0 = vector.load %arg0[%c0, %c0_0] : memref<16x128xf32, #tpu.memory_space<vmem>>, vector<16x128xf32>
    %1 = vector.extract_strided_slice %0 {offsets = [0, 67], sizes = [16, 4], strides = [1, 1]} : vector<16x128xf32> to vector<16x4xf32>
    %2 = vector.extract_strided_slice %0 {offsets = [0, 71], sizes = [16, 4], strides = [1, 1]} : vector<16x128xf32> to vector<16x4xf32>
    %3 = vector.extract_strided_slice %0 {offsets = [0, 75], sizes = [16, 1], strides = [1, 1]} : vector<16x128xf32> to vector<16x1xf32>
    %4 = vector.extract_strided_slice %0 {offsets = [0, 76], sizes = [16, 1], strides = [1, 1]} : vector<16x128xf32> to vector<16x1xf32>
    %5 = vector.extract_strided_slice %0 {offsets = [0, 77], sizes = [16, 1], strides = [1, 1]} : vector<16x128xf32> to vector<16x1xf32>
    %6 = vector.broadcast %3 : vector<16x1xf32> to vector<16x4xf32>
    %7 = arith.mulf %6, %1 : vector<16x4xf32>
    %8 = vector.broadcast %4 : vector<16x1xf32> to vector<16x4xf32>
    %9 = arith.mulf %8, %2 : vector<16x4xf32>
    %10 = arith.addf %7, %9 : vector<16x4xf32>
    %c128 = arith.constant 128 : index
    %c0_1 = arith.constant 0 : index
    %11 = vector.load %arg1[%c128, %c0_1] : memref<768x128xbf16, #tpu.memory_space<vmem>>, vector<4x32xbf16>
    %12 = arith.truncf %10 : vector<16x4xf32> to vector<16x4xbf16>
    %cst = arith.constant dense<0.000000e+00> : vector<16x32xf32>
    %13 = tpu.matmul %12, %11, %cst {dimension_numbers = #tpu.dot_dimension_numbers<[1], [0], [0], [1], [0, 0, 1, 1], [], []>} : vector<16x4xbf16>, vector<4x32xbf16>, vector<16x32xf32> -> vector<16x32xf32>
    %c0_2 = arith.constant 0 : index
    %c0_3 = arith.constant 0 : index
    %14 = vector.load %arg2[%c0_2, %c0_3] : memref<24x128xf32, #tpu.memory_space<vmem>>, vector<1x32xf32>
    %15 = vector.broadcast %14 : vector<1x32xf32> to vector<16x32xf32>
    %16 = arith.addf %13, %15 : vector<16x32xf32>
    %17 = vector.extract_strided_slice %0 {offsets = [0, 32], sizes = [16, 35], strides = [1, 1]} : vector<16x128xf32> to vector<16x35xf32>
    %c144 = arith.constant 144 : index
    %c0_4 = arith.constant 0 : index
    %18 = vector.load %arg1[%c144, %c0_4] : memref<768x128xbf16, #tpu.memory_space<vmem>>, vector<35x64xbf16>
    %19 = arith.truncf %17 : vector<16x35xf32> to vector<16x35xbf16>
    %cst_5 = arith.constant dense<0.000000e+00> : vector<16x64xf32>
    %20 = tpu.matmul %19, %18, %cst_5 {dimension_numbers = #tpu.dot_dimension_numbers<[1], [0], [0], [1], [0, 0, 1, 1], [], []>} : vector<16x35xbf16>, vector<35x64xbf16>, vector<16x64xf32> -> vector<16x64xf32>
    %c1 = arith.constant 1 : index
    %c0_6 = arith.constant 0 : index
    %21 = vector.load %arg2[%c1, %c0_6] : memref<24x128xf32, #tpu.memory_space<vmem>>, vector<1x64xf32>
    %22 = vector.broadcast %21 : vector<1x64xf32> to vector<16x64xf32>
    %23 = arith.addf %20, %22 : vector<16x64xf32>
    %24 = vector.extract_strided_slice %0 {offsets = [0, 0], sizes = [16, 32], strides = [1, 1]} : vector<16x128xf32> to vector<16x32xf32>
    %c192 = arith.constant 192 : index
    %c0_7 = arith.constant 0 : index
    %25 = vector.load %arg1[%c192, %c0_7] : memref<768x128xbf16, #tpu.memory_space<vmem>>, vector<32x32xbf16>
    %26 = arith.truncf %24 : vector<16x32xf32> to vector<16x32xbf16>
    %cst_8 = arith.constant dense<0.000000e+00> : vector<16x32xf32>
    %27 = tpu.matmul %26, %25, %cst_8 {dimension_numbers = #tpu.dot_dimension_numbers<[1], [0], [0], [1], [0, 0, 1, 1], [], []>} : vector<16x32xbf16>, vector<32x32xbf16>, vector<16x32xf32> -> vector<16x32xf32>
    %c2 = arith.constant 2 : index
    %c0_9 = arith.constant 0 : index
    %28 = vector.load %arg2[%c2, %c0_9] : memref<24x128xf32, #tpu.memory_space<vmem>>, vector<1x32xf32>
    %29 = vector.broadcast %28 : vector<1x32xf32> to vector<16x32xf32>
    %30 = arith.addf %27, %29 : vector<16x32xf32>
    %31 = arith.negf %30 : vector<16x32xf32>
    %32 = math.exp %31 : vector<16x32xf32>
    %cst_10 = arith.constant 1.000000e+00 : f32
    %33 = vector.broadcast %cst_10 : f32 to vector<16x32xf32>
    %34 = arith.addf %33, %32 : vector<16x32xf32>
    %35 = arith.divf %33, %34 : vector<16x32xf32>
    %36 = arith.mulf %30, %35 : vector<16x32xf32>
    %c224 = arith.constant 224 : index
    %c0_11 = arith.constant 0 : index
    %37 = vector.load %arg1[%c224, %c0_11] : memref<768x128xbf16, #tpu.memory_space<vmem>>, vector<32x32xbf16>
    %38 = arith.truncf %36 : vector<16x32xf32> to vector<16x32xbf16>
    %cst_12 = arith.constant dense<0.000000e+00> : vector<16x32xf32>
    %39 = tpu.matmul %38, %37, %cst_12 {dimension_numbers = #tpu.dot_dimension_numbers<[1], [0], [0], [1], [0, 0, 1, 1], [], []>} : vector<16x32xbf16>, vector<32x32xbf16>, vector<16x32xf32> -> vector<16x32xf32>
    %c3 = arith.constant 3 : index
    %c0_13 = arith.constant 0 : index
    %40 = vector.load %arg2[%c3, %c0_13] : memref<24x128xf32, #tpu.memory_space<vmem>>, vector<1x32xf32>
    %41 = vector.broadcast %40 : vector<1x32xf32> to vector<16x32xf32>
    %42 = arith.addf %39, %41 : vector<16x32xf32>
    %43 = arith.addf %16, %42 : vector<16x32xf32>
    %c0_14 = arith.constant 0 : index
    %c0_15 = arith.constant 0 : index
    %44 = vector.load %arg1[%c0_14, %c0_15] : memref<768x128xbf16, #tpu.memory_space<vmem>>, vector<64x64xbf16>
    %c0_16 = arith.constant 0 : index
    %c0_17 = arith.constant 0 : index
    %45 = vector.load %arg1[%c0_16, %c0_17] : memref<768x128xbf16, #tpu.memory_space<vmem>>, vector<128x128xbf16>
    %cst_18 = arith.constant dense<0.000000e+00> : vector<16xf32>
    %46 = vector.multi_reduction <add>, %43, %cst_18 [1] : vector<16x32xf32> to vector<16xf32>
    %47 = vector.shape_cast %46 : vector<16xf32> to vector<16x1xf32>
    %cst_19 = arith.constant 3.200000e+01 : f32
    %48 = vector.broadcast %cst_19 : f32 to vector<16x1xf32>
    %49 = arith.divf %47, %48 : vector<16x1xf32>
    %50 = vector.broadcast %49 : vector<16x1xf32> to vector<16x32xf32>
    %51 = arith.subf %43, %50 : vector<16x32xf32>
    %52 = arith.mulf %51, %51 : vector<16x32xf32>
    %cst_20 = arith.constant dense<0.000000e+00> : vector<16xf32>
    %53 = vector.multi_reduction <add>, %52, %cst_20 [1] : vector<16x32xf32> to vector<16xf32>
    %54 = vector.shape_cast %53 : vector<16xf32> to vector<16x1xf32>
    %cst_21 = arith.constant 3.200000e+01 : f32
    %55 = vector.broadcast %cst_21 : f32 to vector<16x1xf32>
    %56 = arith.divf %54, %55 : vector<16x1xf32>
    %cst_22 = arith.constant 9.99999974E-6 : f32
    %57 = vector.broadcast %cst_22 : f32 to vector<16x1xf32>
    %58 = arith.addf %56, %57 : vector<16x1xf32>
    %59 = math.rsqrt %58 : vector<16x1xf32>
    %60 = vector.broadcast %59 : vector<16x1xf32> to vector<16x32xf32>
    %61 = arith.mulf %51, %60 : vector<16x32xf32>
    %c4 = arith.constant 4 : index
    %c0_23 = arith.constant 0 : index
    %62 = vector.load %arg2[%c4, %c0_23] : memref<24x128xf32, #tpu.memory_space<vmem>>, vector<1x32xf32>
    %63 = vector.broadcast %62 : vector<1x32xf32> to vector<16x32xf32>
    %64 = arith.mulf %61, %63 : vector<16x32xf32>
    %c5 = arith.constant 5 : index
    %c0_24 = arith.constant 0 : index
    %65 = vector.load %arg2[%c5, %c0_24] : memref<24x128xf32, #tpu.memory_space<vmem>>, vector<1x32xf32>
    %66 = vector.broadcast %65 : vector<1x32xf32> to vector<16x32xf32>
    %67 = arith.addf %64, %66 : vector<16x32xf32>
    %c256 = arith.constant 256 : index
    %c0_25 = arith.constant 0 : index
    %68 = vector.load %arg1[%c256, %c0_25] : memref<768x128xbf16, #tpu.memory_space<vmem>>, vector<32x64xbf16>
    %69 = arith.truncf %67 : vector<16x32xf32> to vector<16x32xbf16>
    %cst_26 = arith.constant dense<0.000000e+00> : vector<16x64xf32>
    %70 = tpu.matmul %69, %68, %cst_26 {dimension_numbers = #tpu.dot_dimension_numbers<[1], [0], [0], [1], [0, 0, 1, 1], [], []>} : vector<16x32xbf16>, vector<32x64xbf16>, vector<16x64xf32> -> vector<16x64xf32>
    %c10 = arith.constant 10 : index
    %c0_27 = arith.constant 0 : index
    %71 = vector.load %arg2[%c10, %c0_27] : memref<24x128xf32, #tpu.memory_space<vmem>>, vector<1x64xf32>
    %72 = vector.broadcast %71 : vector<1x64xf32> to vector<16x64xf32>
    %73 = arith.addf %70, %72 : vector<16x64xf32>
    %c288 = arith.constant 288 : index
    %c0_28 = arith.constant 0 : index
    %74 = vector.load %arg1[%c288, %c0_28] : memref<768x128xbf16, #tpu.memory_space<vmem>>, vector<32x64xbf16>
    %75 = arith.truncf %67 : vector<16x32xf32> to vector<16x32xbf16>
    %cst_29 = arith.constant dense<0.000000e+00> : vector<16x64xf32>
    %76 = tpu.matmul %75, %74, %cst_29 {dimension_numbers = #tpu.dot_dimension_numbers<[1], [0], [0], [1], [0, 0, 1, 1], [], []>} : vector<16x32xbf16>, vector<32x64xbf16>, vector<16x64xf32> -> vector<16x64xf32>
    %c11 = arith.constant 11 : index
    %c0_30 = arith.constant 0 : index
    %77 = vector.load %arg2[%c11, %c0_30] : memref<24x128xf32, #tpu.memory_space<vmem>>, vector<1x64xf32>
    %78 = vector.broadcast %77 : vector<1x64xf32> to vector<16x64xf32>
    %79 = arith.addf %76, %78 : vector<16x64xf32>
    %80 = vector.extract_strided_slice %73 {offsets = [0, 0], sizes = [8, 64], strides = [1, 1]} : vector<16x64xf32> to vector<8x64xf32>
    %81 = vector.extract_strided_slice %79 {offsets = [0, 0], sizes = [8, 64], strides = [1, 1]} : vector<16x64xf32> to vector<8x64xf32>
    %82 = arith.mulf %80, %81 : vector<8x64xf32>
    %83 = vector.extract_strided_slice %79 {offsets = [8, 0], sizes = [8, 64], strides = [1, 1]} : vector<16x64xf32> to vector<8x64xf32>
    %84 = arith.mulf %80, %83 : vector<8x64xf32>
    %85 = vector.extract_strided_slice %73 {offsets = [8, 0], sizes = [8, 64], strides = [1, 1]} : vector<16x64xf32> to vector<8x64xf32>
    %86 = vector.extract_strided_slice %79 {offsets = [0, 0], sizes = [8, 64], strides = [1, 1]} : vector<16x64xf32> to vector<8x64xf32>
    %87 = arith.mulf %85, %86 : vector<8x64xf32>
    %88 = vector.extract_strided_slice %79 {offsets = [8, 0], sizes = [8, 64], strides = [1, 1]} : vector<16x64xf32> to vector<8x64xf32>
    %89 = arith.mulf %85, %88 : vector<8x64xf32>
    %90 = tpu.concatenate %82, %84, %87, %89 in 0 : vector<8x64xf32>, vector<8x64xf32>, vector<8x64xf32>, vector<8x64xf32> -> vector<32x64xf32>
    %91 = arith.truncf %90 : vector<32x64xf32> to vector<32x64xbf16>
    %cst_31 = arith.constant dense<0.000000e+00> : vector<32x64xf32>
    %92 = tpu.matmul %91, %44, %cst_31 {dimension_numbers = #tpu.dot_dimension_numbers<[1], [0], [0], [1], [0, 0, 1, 1], [], []>} : vector<32x64xbf16>, vector<64x64xbf16>, vector<32x64xf32> -> vector<32x64xf32>
    %93 = vector.extract_strided_slice %92 {offsets = [0, 0], sizes = [8, 64], strides = [1, 1]} : vector<32x64xf32> to vector<8x64xf32>
    %94 = vector.extract_strided_slice %92 {offsets = [8, 0], sizes = [8, 64], strides = [1, 1]} : vector<32x64xf32> to vector<8x64xf32>
    %95 = arith.maximumf %93, %94 : vector<8x64xf32>
    %96 = arith.subf %93, %95 : vector<8x64xf32>
    %97 = math.exp %96 : vector<8x64xf32>
    %98 = arith.subf %94, %95 : vector<8x64xf32>
    %99 = math.exp %98 : vector<8x64xf32>
    %100 = arith.addf %97, %99 : vector<8x64xf32>
    %101 = tpu.reciprocal %100 {approx = true} : vector<8x64xf32> -> vector<8x64xf32>
    %102 = arith.mulf %97, %101 : vector<8x64xf32>
    %103 = vector.extract_strided_slice %79 {offsets = [0, 0], sizes = [8, 64], strides = [1, 1]} : vector<16x64xf32> to vector<8x64xf32>
    %104 = arith.mulf %102, %103 : vector<8x64xf32>
    %105 = arith.mulf %99, %101 : vector<8x64xf32>
    %106 = vector.extract_strided_slice %79 {offsets = [8, 0], sizes = [8, 64], strides = [1, 1]} : vector<16x64xf32> to vector<8x64xf32>
    %107 = arith.mulf %105, %106 : vector<8x64xf32>
    %108 = arith.addf %104, %107 : vector<8x64xf32>
    %109 = vector.extract_strided_slice %92 {offsets = [16, 0], sizes = [8, 64], strides = [1, 1]} : vector<32x64xf32> to vector<8x64xf32>
    %110 = vector.extract_strided_slice %92 {offsets = [24, 0], sizes = [8, 64], strides = [1, 1]} : vector<32x64xf32> to vector<8x64xf32>
    %111 = arith.maximumf %109, %110 : vector<8x64xf32>
    %112 = arith.subf %109, %111 : vector<8x64xf32>
    %113 = math.exp %112 : vector<8x64xf32>
    %114 = arith.subf %110, %111 : vector<8x64xf32>
    %115 = math.exp %114 : vector<8x64xf32>
    %116 = arith.addf %113, %115 : vector<8x64xf32>
    %117 = tpu.reciprocal %116 {approx = true} : vector<8x64xf32> -> vector<8x64xf32>
    %118 = arith.mulf %113, %117 : vector<8x64xf32>
    %119 = vector.extract_strided_slice %79 {offsets = [0, 0], sizes = [8, 64], strides = [1, 1]} : vector<16x64xf32> to vector<8x64xf32>
    %120 = arith.mulf %118, %119 : vector<8x64xf32>
    %121 = arith.mulf %115, %117 : vector<8x64xf32>
    %122 = vector.extract_strided_slice %79 {offsets = [8, 0], sizes = [8, 64], strides = [1, 1]} : vector<16x64xf32> to vector<8x64xf32>
    %123 = arith.mulf %121, %122 : vector<8x64xf32>
    %124 = arith.addf %120, %123 : vector<8x64xf32>
    %125 = tpu.concatenate %108, %124 in 0 : vector<8x64xf32>, vector<8x64xf32> -> vector<16x64xf32>
    %c320 = arith.constant 320 : index
    %c0_32 = arith.constant 0 : index
    %126 = vector.load %arg1[%c320, %c0_32] : memref<768x128xbf16, #tpu.memory_space<vmem>>, vector<64x32xbf16>
    %127 = arith.truncf %125 : vector<16x64xf32> to vector<16x64xbf16>
    %cst_33 = arith.constant dense<0.000000e+00> : vector<16x32xf32>
    %128 = tpu.matmul %127, %126, %cst_33 {dimension_numbers = #tpu.dot_dimension_numbers<[1], [0], [0], [1], [0, 0, 1, 1], [], []>} : vector<16x64xbf16>, vector<64x32xbf16>, vector<16x32xf32> -> vector<16x32xf32>
    %129 = arith.addf %43, %128 : vector<16x32xf32>
    %c12 = arith.constant 12 : index
    %c0_34 = arith.constant 0 : index
    %130 = vector.load %arg2[%c12, %c0_34] : memref<24x128xf32, #tpu.memory_space<vmem>>, vector<1x32xf32>
    %131 = vector.broadcast %130 : vector<1x32xf32> to vector<16x32xf32>
    %132 = arith.addf %129, %131 : vector<16x32xf32>
    %cst_35 = arith.constant dense<0.000000e+00> : vector<16xf32>
    %133 = vector.multi_reduction <add>, %132, %cst_35 [1] : vector<16x32xf32> to vector<16xf32>
    %134 = vector.shape_cast %133 : vector<16xf32> to vector<16x1xf32>
    %cst_36 = arith.constant 3.200000e+01 : f32
    %135 = vector.broadcast %cst_36 : f32 to vector<16x1xf32>
    %136 = arith.divf %134, %135 : vector<16x1xf32>
    %137 = vector.broadcast %136 : vector<16x1xf32> to vector<16x32xf32>
    %138 = arith.subf %132, %137 : vector<16x32xf32>
    %139 = arith.mulf %138, %138 : vector<16x32xf32>
    %cst_37 = arith.constant dense<0.000000e+00> : vector<16xf32>
    %140 = vector.multi_reduction <add>, %139, %cst_37 [1] : vector<16x32xf32> to vector<16xf32>
    %141 = vector.shape_cast %140 : vector<16xf32> to vector<16x1xf32>
    %cst_38 = arith.constant 3.200000e+01 : f32
    %142 = vector.broadcast %cst_38 : f32 to vector<16x1xf32>
    %143 = arith.divf %141, %142 : vector<16x1xf32>
    %cst_39 = arith.constant 9.99999974E-6 : f32
    %144 = vector.broadcast %cst_39 : f32 to vector<16x1xf32>
    %145 = arith.addf %143, %144 : vector<16x1xf32>
    %146 = math.rsqrt %145 : vector<16x1xf32>
    %147 = vector.broadcast %146 : vector<16x1xf32> to vector<16x32xf32>
    %148 = arith.mulf %138, %147 : vector<16x32xf32>
    %c6 = arith.constant 6 : index
    %c0_40 = arith.constant 0 : index
    %149 = vector.load %arg2[%c6, %c0_40] : memref<24x128xf32, #tpu.memory_space<vmem>>, vector<1x32xf32>
    %150 = vector.broadcast %149 : vector<1x32xf32> to vector<16x32xf32>
    %151 = arith.mulf %148, %150 : vector<16x32xf32>
    %c7 = arith.constant 7 : index
    %c0_41 = arith.constant 0 : index
    %152 = vector.load %arg2[%c7, %c0_41] : memref<24x128xf32, #tpu.memory_space<vmem>>, vector<1x32xf32>
    %153 = vector.broadcast %152 : vector<1x32xf32> to vector<16x32xf32>
    %154 = arith.addf %151, %153 : vector<16x32xf32>
    %c384 = arith.constant 384 : index
    %c0_42 = arith.constant 0 : index
    %155 = vector.load %arg1[%c384, %c0_42] : memref<768x128xbf16, #tpu.memory_space<vmem>>, vector<32x128xbf16>
    %156 = arith.truncf %154 : vector<16x32xf32> to vector<16x32xbf16>
    %cst_43 = arith.constant dense<0.000000e+00> : vector<16x128xf32>
    %157 = tpu.matmul %156, %155, %cst_43 {dimension_numbers = #tpu.dot_dimension_numbers<[1], [0], [0], [1], [0, 0, 1, 1], [], []>} : vector<16x32xbf16>, vector<32x128xbf16>, vector<16x128xf32> -> vector<16x128xf32>
    %c13 = arith.constant 13 : index
    %c0_44 = arith.constant 0 : index
    %158 = vector.load %arg2[%c13, %c0_44] : memref<24x128xf32, #tpu.memory_space<vmem>>, vector<1x128xf32>
    %159 = vector.broadcast %158 : vector<1x128xf32> to vector<16x128xf32>
    %160 = arith.addf %157, %159 : vector<16x128xf32>
    %c416 = arith.constant 416 : index
    %c0_45 = arith.constant 0 : index
    %161 = vector.load %arg1[%c416, %c0_45] : memref<768x128xbf16, #tpu.memory_space<vmem>>, vector<64x128xbf16>
    %162 = arith.truncf %23 : vector<16x64xf32> to vector<16x64xbf16>
    %cst_46 = arith.constant dense<0.000000e+00> : vector<16x128xf32>
    %163 = tpu.matmul %162, %161, %cst_46 {dimension_numbers = #tpu.dot_dimension_numbers<[1], [0], [0], [1], [0, 0, 1, 1], [], []>} : vector<16x64xbf16>, vector<64x128xbf16>, vector<16x128xf32> -> vector<16x128xf32>
    %c14 = arith.constant 14 : index
    %c0_47 = arith.constant 0 : index
    %164 = vector.load %arg2[%c14, %c0_47] : memref<24x128xf32, #tpu.memory_space<vmem>>, vector<1x128xf32>
    %165 = vector.broadcast %164 : vector<1x128xf32> to vector<16x128xf32>
    %166 = arith.addf %163, %165 : vector<16x128xf32>
    %167 = vector.extract_strided_slice %160 {offsets = [0, 0], sizes = [8, 128], strides = [1, 1]} : vector<16x128xf32> to vector<8x128xf32>
    %168 = vector.extract_strided_slice %166 {offsets = [0, 0], sizes = [8, 128], strides = [1, 1]} : vector<16x128xf32> to vector<8x128xf32>
    %169 = arith.mulf %167, %168 : vector<8x128xf32>
    %170 = vector.extract_strided_slice %166 {offsets = [8, 0], sizes = [8, 128], strides = [1, 1]} : vector<16x128xf32> to vector<8x128xf32>
    %171 = arith.mulf %167, %170 : vector<8x128xf32>
    %172 = vector.extract_strided_slice %160 {offsets = [8, 0], sizes = [8, 128], strides = [1, 1]} : vector<16x128xf32> to vector<8x128xf32>
    %173 = vector.extract_strided_slice %166 {offsets = [0, 0], sizes = [8, 128], strides = [1, 1]} : vector<16x128xf32> to vector<8x128xf32>
    %174 = arith.mulf %172, %173 : vector<8x128xf32>
    %175 = vector.extract_strided_slice %166 {offsets = [8, 0], sizes = [8, 128], strides = [1, 1]} : vector<16x128xf32> to vector<8x128xf32>
    %176 = arith.mulf %172, %175 : vector<8x128xf32>
    %177 = tpu.concatenate %169, %171, %174, %176 in 0 : vector<8x128xf32>, vector<8x128xf32>, vector<8x128xf32>, vector<8x128xf32> -> vector<32x128xf32>
    %178 = arith.truncf %177 : vector<32x128xf32> to vector<32x128xbf16>
    %cst_48 = arith.constant dense<0.000000e+00> : vector<32x128xf32>
    %179 = tpu.matmul %178, %45, %cst_48 {dimension_numbers = #tpu.dot_dimension_numbers<[1], [0], [0], [1], [0, 0, 1, 1], [], []>} : vector<32x128xbf16>, vector<128x128xbf16>, vector<32x128xf32> -> vector<32x128xf32>
    %180 = vector.extract_strided_slice %179 {offsets = [0, 0], sizes = [8, 128], strides = [1, 1]} : vector<32x128xf32> to vector<8x128xf32>
    %181 = vector.extract_strided_slice %179 {offsets = [8, 0], sizes = [8, 128], strides = [1, 1]} : vector<32x128xf32> to vector<8x128xf32>
    %182 = arith.maximumf %180, %181 : vector<8x128xf32>
    %183 = arith.subf %180, %182 : vector<8x128xf32>
    %184 = math.exp %183 : vector<8x128xf32>
    %185 = arith.subf %181, %182 : vector<8x128xf32>
    %186 = math.exp %185 : vector<8x128xf32>
    %187 = arith.addf %184, %186 : vector<8x128xf32>
    %188 = tpu.reciprocal %187 {approx = true} : vector<8x128xf32> -> vector<8x128xf32>
    %189 = arith.mulf %184, %188 : vector<8x128xf32>
    %190 = vector.extract_strided_slice %166 {offsets = [0, 0], sizes = [8, 128], strides = [1, 1]} : vector<16x128xf32> to vector<8x128xf32>
    %191 = arith.mulf %189, %190 : vector<8x128xf32>
    %192 = arith.mulf %186, %188 : vector<8x128xf32>
    %193 = vector.extract_strided_slice %166 {offsets = [8, 0], sizes = [8, 128], strides = [1, 1]} : vector<16x128xf32> to vector<8x128xf32>
    %194 = arith.mulf %192, %193 : vector<8x128xf32>
    %195 = arith.addf %191, %194 : vector<8x128xf32>
    %196 = vector.extract_strided_slice %179 {offsets = [16, 0], sizes = [8, 128], strides = [1, 1]} : vector<32x128xf32> to vector<8x128xf32>
    %197 = vector.extract_strided_slice %179 {offsets = [24, 0], sizes = [8, 128], strides = [1, 1]} : vector<32x128xf32> to vector<8x128xf32>
    %198 = arith.maximumf %196, %197 : vector<8x128xf32>
    %199 = arith.subf %196, %198 : vector<8x128xf32>
    %200 = math.exp %199 : vector<8x128xf32>
    %201 = arith.subf %197, %198 : vector<8x128xf32>
    %202 = math.exp %201 : vector<8x128xf32>
    %203 = arith.addf %200, %202 : vector<8x128xf32>
    %204 = tpu.reciprocal %203 {approx = true} : vector<8x128xf32> -> vector<8x128xf32>
    %205 = arith.mulf %200, %204 : vector<8x128xf32>
    %206 = vector.extract_strided_slice %166 {offsets = [0, 0], sizes = [8, 128], strides = [1, 1]} : vector<16x128xf32> to vector<8x128xf32>
    %207 = arith.mulf %205, %206 : vector<8x128xf32>
    %208 = arith.mulf %202, %204 : vector<8x128xf32>
    %209 = vector.extract_strided_slice %166 {offsets = [8, 0], sizes = [8, 128], strides = [1, 1]} : vector<16x128xf32> to vector<8x128xf32>
    %210 = arith.mulf %208, %209 : vector<8x128xf32>
    %211 = arith.addf %207, %210 : vector<8x128xf32>
    %212 = tpu.concatenate %195, %211 in 0 : vector<8x128xf32>, vector<8x128xf32> -> vector<16x128xf32>
    %c480 = arith.constant 480 : index
    %c0_49 = arith.constant 0 : index
    %213 = vector.load %arg1[%c480, %c0_49] : memref<768x128xbf16, #tpu.memory_space<vmem>>, vector<128x32xbf16>
    %214 = arith.truncf %212 : vector<16x128xf32> to vector<16x128xbf16>
    %cst_50 = arith.constant dense<0.000000e+00> : vector<16x32xf32>
    %215 = tpu.matmul %214, %213, %cst_50 {dimension_numbers = #tpu.dot_dimension_numbers<[1], [0], [0], [1], [0, 0, 1, 1], [], []>} : vector<16x128xbf16>, vector<128x32xbf16>, vector<16x32xf32> -> vector<16x32xf32>
    %216 = arith.addf %132, %215 : vector<16x32xf32>
    %c15 = arith.constant 15 : index
    %c0_51 = arith.constant 0 : index
    %217 = vector.load %arg2[%c15, %c0_51] : memref<24x128xf32, #tpu.memory_space<vmem>>, vector<1x32xf32>
    %218 = vector.broadcast %217 : vector<1x32xf32> to vector<16x32xf32>
    %219 = arith.addf %216, %218 : vector<16x32xf32>
    %cst_52 = arith.constant dense<0.000000e+00> : vector<16xf32>
    %220 = vector.multi_reduction <add>, %219, %cst_52 [1] : vector<16x32xf32> to vector<16xf32>
    %221 = vector.shape_cast %220 : vector<16xf32> to vector<16x1xf32>
    %cst_53 = arith.constant 3.200000e+01 : f32
    %222 = vector.broadcast %cst_53 : f32 to vector<16x1xf32>
    %223 = arith.divf %221, %222 : vector<16x1xf32>
    %224 = vector.broadcast %223 : vector<16x1xf32> to vector<16x32xf32>
    %225 = arith.subf %219, %224 : vector<16x32xf32>
    %226 = arith.mulf %225, %225 : vector<16x32xf32>
    %cst_54 = arith.constant dense<0.000000e+00> : vector<16xf32>
    %227 = vector.multi_reduction <add>, %226, %cst_54 [1] : vector<16x32xf32> to vector<16xf32>
    %228 = vector.shape_cast %227 : vector<16xf32> to vector<16x1xf32>
    %cst_55 = arith.constant 3.200000e+01 : f32
    %229 = vector.broadcast %cst_55 : f32 to vector<16x1xf32>
    %230 = arith.divf %228, %229 : vector<16x1xf32>
    %cst_56 = arith.constant 9.99999974E-6 : f32
    %231 = vector.broadcast %cst_56 : f32 to vector<16x1xf32>
    %232 = arith.addf %230, %231 : vector<16x1xf32>
    %233 = math.rsqrt %232 : vector<16x1xf32>
    %234 = vector.broadcast %233 : vector<16x1xf32> to vector<16x32xf32>
    %235 = arith.mulf %225, %234 : vector<16x32xf32>
    %c8 = arith.constant 8 : index
    %c0_57 = arith.constant 0 : index
    %236 = vector.load %arg2[%c8, %c0_57] : memref<24x128xf32, #tpu.memory_space<vmem>>, vector<1x32xf32>
    %237 = vector.broadcast %236 : vector<1x32xf32> to vector<16x32xf32>
    %238 = arith.mulf %235, %237 : vector<16x32xf32>
    %c9 = arith.constant 9 : index
    %c0_58 = arith.constant 0 : index
    %239 = vector.load %arg2[%c9, %c0_58] : memref<24x128xf32, #tpu.memory_space<vmem>>, vector<1x32xf32>
    %240 = vector.broadcast %239 : vector<1x32xf32> to vector<16x32xf32>
    %241 = arith.addf %238, %240 : vector<16x32xf32>
    %c608 = arith.constant 608 : index
    %c0_59 = arith.constant 0 : index
    %242 = vector.load %arg1[%c608, %c0_59] : memref<768x128xbf16, #tpu.memory_space<vmem>>, vector<32x64xbf16>
    %243 = arith.truncf %241 : vector<16x32xf32> to vector<16x32xbf16>
    %cst_60 = arith.constant dense<0.000000e+00> : vector<16x64xf32>
    %244 = tpu.matmul %243, %242, %cst_60 {dimension_numbers = #tpu.dot_dimension_numbers<[1], [0], [0], [1], [0, 0, 1, 1], [], []>} : vector<16x32xbf16>, vector<32x64xbf16>, vector<16x64xf32> -> vector<16x64xf32>
    %c16 = arith.constant 16 : index
    %c0_61 = arith.constant 0 : index
    %245 = vector.load %arg2[%c16, %c0_61] : memref<24x128xf32, #tpu.memory_space<vmem>>, vector<1x64xf32>
    %246 = vector.broadcast %245 : vector<1x64xf32> to vector<16x64xf32>
    %247 = arith.addf %244, %246 : vector<16x64xf32>
    %cst_62 = arith.constant 0.000000e+00 : f32
    %248 = vector.broadcast %cst_62 : f32 to vector<16x64xf32>
    %249 = arith.maximumf %247, %248 : vector<16x64xf32>
    %c640 = arith.constant 640 : index
    %c0_63 = arith.constant 0 : index
    %250 = vector.load %arg1[%c640, %c0_63] : memref<768x128xbf16, #tpu.memory_space<vmem>>, vector<64x32xbf16>
    %251 = arith.truncf %249 : vector<16x64xf32> to vector<16x64xbf16>
    %cst_64 = arith.constant dense<0.000000e+00> : vector<16x32xf32>
    %252 = tpu.matmul %251, %250, %cst_64 {dimension_numbers = #tpu.dot_dimension_numbers<[1], [0], [0], [1], [0, 0, 1, 1], [], []>} : vector<16x64xbf16>, vector<64x32xbf16>, vector<16x32xf32> -> vector<16x32xf32>
    %253 = arith.addf %219, %252 : vector<16x32xf32>
    %c17 = arith.constant 17 : index
    %c0_65 = arith.constant 0 : index
    %254 = vector.load %arg2[%c17, %c0_65] : memref<24x128xf32, #tpu.memory_space<vmem>>, vector<1x32xf32>
    %255 = vector.broadcast %254 : vector<1x32xf32> to vector<16x32xf32>
    %256 = arith.addf %253, %255 : vector<16x32xf32>
    %c704 = arith.constant 704 : index
    %c0_66 = arith.constant 0 : index
    %257 = vector.load %arg1[%c704, %c0_66] : memref<768x128xbf16, #tpu.memory_space<vmem>>, vector<32x32xbf16>
    %258 = arith.truncf %256 : vector<16x32xf32> to vector<16x32xbf16>
    %cst_67 = arith.constant dense<0.000000e+00> : vector<16x32xf32>
    %259 = tpu.matmul %258, %257, %cst_67 {dimension_numbers = #tpu.dot_dimension_numbers<[1], [0], [0], [1], [0, 0, 1, 1], [], []>} : vector<16x32xbf16>, vector<32x32xbf16>, vector<16x32xf32> -> vector<16x32xf32>
    %c18 = arith.constant 18 : index
    %c0_68 = arith.constant 0 : index
    %260 = vector.load %arg2[%c18, %c0_68] : memref<24x128xf32, #tpu.memory_space<vmem>>, vector<1x32xf32>
    %261 = vector.broadcast %260 : vector<1x32xf32> to vector<16x32xf32>
    %262 = arith.addf %259, %261 : vector<16x32xf32>
    %cst_69 = arith.constant 0.000000e+00 : f32
    %263 = vector.broadcast %cst_69 : f32 to vector<16x32xf32>
    %264 = arith.maximumf %262, %263 : vector<16x32xf32>
    %c736 = arith.constant 736 : index
    %c0_70 = arith.constant 0 : index
    %265 = vector.load %arg1[%c736, %c0_70] : memref<768x128xbf16, #tpu.memory_space<vmem>>, vector<32x4xbf16>
    %266 = arith.truncf %264 : vector<16x32xf32> to vector<16x32xbf16>
    %cst_71 = arith.constant dense<0.000000e+00> : vector<16x4xf32>
    %267 = tpu.matmul %266, %265, %cst_71 {dimension_numbers = #tpu.dot_dimension_numbers<[1], [0], [0], [1], [0, 0, 1, 1], [], []>} : vector<16x32xbf16>, vector<32x4xbf16>, vector<16x4xf32> -> vector<16x4xf32>
    %c19 = arith.constant 19 : index
    %c0_72 = arith.constant 0 : index
    %268 = vector.load %arg2[%c19, %c0_72] : memref<24x128xf32, #tpu.memory_space<vmem>>, vector<1x4xf32>
    %269 = vector.broadcast %268 : vector<1x4xf32> to vector<16x4xf32>
    %270 = arith.addf %267, %269 : vector<16x4xf32>
    %271 = arith.subf %2, %270 : vector<16x4xf32>
    %272 = vector.broadcast %5 : vector<16x1xf32> to vector<16x4xf32>
    %273 = arith.mulf %271, %272 : vector<16x4xf32>
    %274 = arith.mulf %273, %273 : vector<16x4xf32>
    %275 = vector.shape_cast %274 : vector<16x4xf32> to vector<1x16x4xf32>
    %cst_73 = arith.constant dense<0.000000e+00> : vector<1xf32>
    %276 = vector.multi_reduction <add>, %275, %cst_73 [1, 2] : vector<1x16x4xf32> to vector<1xf32>
    %277 = vector.shape_cast %276 : vector<1xf32> to vector<1x1x1xf32>
    %278 = vector.extract %277[0, 0, 0] : f32 from vector<1x1x1xf32>
    %cst_74 = arith.constant 1.562500e-02 : f32
    %279 = arith.mulf %278, %cst_74 : f32
    %c0_75 = arith.constant 0 : index
    %c0_76 = arith.constant 0 : index
    %280 = memref.load %arg3[%c0_75, %c0_76] : memref<1x1xf32, #tpu.memory_space<smem>>
    memref.store %279, %arg3[%c0_75, %c0_76] : memref<1x1xf32, #tpu.memory_space<smem>>
    return
  }
}

</mosaic_0001>

<llo_original>
// kernel: _lambda_.1
$region0: #{_lambda_.1}
  #allocation0 [shape = 'u32[]', space=smem, size = 0x4, offset = 0x4, fixed_abs, tag = 'smem constant byte address 0x4 - core index']
  #allocation1 [shape = 'u32[144,128]{1,0:T(1,128)}', space=vmem, size = 0x12000, scoped, tag = 'internal scratch']
  %s0 = inlined_call_operand.vmem [shape: f32[16,128], index: 0, kind: input, shape index: {}]
  %s1 = inlined_call_operand.vmem [shape: bf16[768,128], index: 1, kind: input, shape index: {}]
  %s2 = inlined_call_operand.vmem [shape: f32[24,128], index: 2, kind: input, shape index: {}]
  %s3 = inlined_call_operand.hbm [shape: f32[1,1], index: 3, kind: output, shape index: {}]
  %s4 = sld [smem:[#allocation0]]
  $region22: #{_lambda_.1} parent=0
    _
  %s6 = ssub.s32 1, %s4
  %s7 = scalar_select 0, %s6, %s4
  $region1: #{_lambda_.1} parent=0
    #allocation2 [shape = 'u8[512]{0}', space=smem, size = 0x200, scoped, tag = 'output window, operand 0, single buffered']
    #allocation3 [shape = 's32[1]{0}', space=sflag, size = 0x4, scoped, tag = 'scoped memory for _lambda_.1']
    %8 = vsyncpa [#allocation3], 0
    // Predicated region
    $region2: #{_lambda_.1} parent=1 // pred_check
      _
    $region3: #{_lambda_.1} parent=1 // pred_check_branch
      %10 = sbr.rel (0) target = $region5
    $region4: #{_lambda_.1} parent=1 // pred_region
      _
    $region5: #{_lambda_.1} parent=1 // pred_fallthru
      _
    // Predicated region
    $region6: #{_lambda_.1} parent=1 // pred_check
      _
    $region7: #{_lambda_.1} parent=1 // pred_check_branch
      %12 = sbr.rel (0) target = $region9
    $region8: #{_lambda_.1} parent=1 // pred_region
      _
    $region9: #{_lambda_.1} parent=1 // pred_fallthru
      _
    // Predicated region
    $region10: #{_lambda_.1} parent=1 // pred_check
      _
    $region11: #{_lambda_.1} parent=1 // pred_check_branch
      %14 = sbr.rel (0) target = $region13
    $region12: #{_lambda_.1} parent=1 // pred_region
      _
    $region13: #{_lambda_.1} parent=1 // pred_fallthru
      _
    %v16 = vld [vmem:[%s0] sm:$0xff]
    %v17 = vld [vmem:[%s0 + $0x8] sm:$0xff]
    %19 = vset.pattern.permute.xlu0 75
    %20 = vperm.xlu0 %19, %v16
    %v21 = vpop.permute.xlu0 %20
    %24 = vset.pattern.permute.xlu0 75
    %25 = vperm.xlu0 %24, %v17
    %v26 = vpop.permute.xlu0 %25
    %v28 = vmul.f32 %v21, %v16
    %v29 = vmul.f32 %v26, %v17
    %30 = vset.pattern.permute.xlu0 76
    %31 = vperm.xlu0 %30, %v16
    %v32 = vpop.permute.xlu0 %31
    %34 = vset.pattern.permute.xlu0 76
    %35 = vperm.xlu0 %34, %v17
    %v36 = vpop.permute.xlu0 %35
    %v38 = vmul.f32 %v32, %v16
    %v39 = vmul.f32 %v36, %v17
    %42 = vrot.lane.b32.xlu0 %v38, 124
    %v43 = vpop.permute.xlu0 %42
    %44 = vrot.lane.b32.xlu0 %v39, 124
    %v45 = vpop.permute.xlu0 %44
    %v48 = vadd.f32 %v28, %v43
    %v49 = vadd.f32 %v29, %v45
    %v50 = vld [vmem:[%s1 + $0x40] sm:$0x3]
    %v51 = vpack.c.bf16 %v49, %v48
    %v52 = vld [vmem:[%s2] sm:$0x1]
    %v53 = vlaneseq
    %v54 = vshrl.u32 %v53, 7
    %v55 = vsub.s32 0, %v54
    %v56 = vrot.slane %v52, %v55
    %58 = vrot.lane.b32.xlu0 %v51, 61
    %v59 = vpop.permute.xlu0 %58
    %vm60 = vcmask 31744
    %v62 = vsel %vm60, %v59, 0
    %vm64 = vcmask 1041408
    %v66 = vsel %vm64, %v50, 0
    %68 = vmatprep.subr.bf16.mxu0 0
    %69 = vmatpush1.bf16.msra.mxu0 %v66
    %70 = vmatprep.subr.bf16.mxu0 0
    %71 = vmatpush1.bf16.msra.mxu0 0
    %72 = vmatprep.subr.bf16.mxu0 0
    %73 = vmatpush1.bf16.msra.mxu0 0
    %74 = vmatprep.subr.bf16.mxu0 0
    %75 = vmatpush1.bf16.msra.mxu0 0
    %76 = vmatprep.subr.bf16.mxu0 0
    %77 = vmatpush1.bf16.msra.mxu0 0
    %78 = vmatprep.subr.bf16.mxu0 0
    %79 = vmatpush1.bf16.msra.mxu0 0
    %80 = vmatprep.subr.bf16.mxu0 0
    %81 = vmatpush1.bf16.msra.mxu0 0
    %82 = vmatprep.subr.bf16.mxu0 0
    %83 = vmatpush1.bf16.msra.mxu0 0
    %84 = vmatprep.subr.bf16.mxu0 0
    %85 = vmatpush1.bf16.msra.mxu0 0
    %86 = vmatprep.subr.bf16.mxu0 0
    %87 = vmatpush1.bf16.msra.mxu0 0
    %88 = vmatprep.subr.bf16.mxu0 0
    %89 = vmatpush1.bf16.msra.mxu0 0
    %90 = vmatprep.subr.bf16.mxu0 0
    %91 = vmatpush1.bf16.msra.mxu0 0
    %92 = vmatprep.subr.bf16.mxu0 0
    %93 = vmatpush1.bf16.msra.mxu0 0
    %94 = vmatprep.subr.bf16.mxu0 0
    %95 = vmatpush1.bf16.msra.mxu0 0
    %96 = vmatprep.subr.bf16.mxu0 0
    %97 = vmatpush1.bf16.msra.mxu0 0
    %98 = vmatprep.subr.bf16.mxu0 0
    %99 = vmatpush1.bf16.msra.mxu0 0
    %100 = vmatprep.mubr.bf16.mxu0 0
    %101 = vmatmul.mubr.bf16.gmra.mrb[0].mxu0 %v62
    %v102 = vpop.f32.mrb[0].mxu0
    %v103 = vadd.f32 %v56, %v102
    %v104 = vpop.f32.mrb[0].mxu0
    %v105 = vpop.f32.mrb[0].mxu0
    %v106 = vadd.f32 %v56, %v105
    %v107 = vpop.f32.mrb[0].mxu0
    %108 = vdwg.mxu0
    %v109 = vld [vmem:[%s1 + $0x48] sm:$0xf]
    %v110 = vld [vmem:[%s1 + $0x4c] sm:$0xf]
    %v111 = vld [vmem:[%s1 + $0x50] sm:$0xf]
    %v112 = vld [vmem:[%s1 + $0x54] sm:$0xf]
    %v113 = vld [vmem:[%s1 + $0x58] sm:$0x3]
    %v114 = vpack.c.bf16 %v17, %v16
    %v115 = vld [vmem:[%s2 + $0x1] sm:$0x1]
    %v116 = vlaneseq
    %v117 = vshrl.u32 %v116, 7
    %v118 = vsub.s32 0, %v117
    %v119 = vrot.slane %v115, %v118
    %121 = vrot.lane.b32.xlu0 %v114, 96
    %v122 = vpop.permute.xlu0 %121
    %v128 = vunpack.c.l.b16 %v109
    %v129 = vunpack.c.l.b16 %v110
    %v130 = vunpack.c.l.b16 %v111
    %v131 = vunpack.c.l.b16 %v112
    %v132 = vunpack.c.l.b16 %v113
    %v133 = vpack.c.b16 %v129, %v128
    %v134 = vpack.c.b16 %v131, %v130
    %v135 = vpack.c.b16 %v132, %v132
    %vm138 = vcmask 285696
    %v140 = vsel %vm138, %v122, 0
    %vm142 = vcmask 1040384
    %v143 = vsel %vm142, 4294967295, 65535
    %v144 = vsel %vm64, %v143, 0
    %v146 = vand.u32 %v135, %v144
    %148 = vmatprep.subr.bf16.mxu0 0
    %149 = vmatpush1.bf16.msra.mxu0 %v133
    %150 = vmatprep.subr.bf16.mxu0 0
    %151 = vmatpush1.bf16.msra.mxu0 %v134
    %152 = vmatprep.subr.bf16.mxu0 0
    %153 = vmatpush1.bf16.msra.mxu0 %v146
    %154 = vmatprep.subr.bf16.mxu0 0
    %155 = vmatpush1.bf16.msra.mxu0 0
    %156 = vmatprep.subr.bf16.mxu0 0
    %157 = vmatpush1.bf16.msra.mxu0 0
    %158 = vmatprep.subr.bf16.mxu0 0
    %159 = vmatpush1.bf16.msra.mxu0 0
    %160 = vmatprep.subr.bf16.mxu0 0
    %161 = vmatpush1.bf16.msra.mxu0 0
    %162 = vmatprep.subr.bf16.mxu0 0
    %163 = vmatpush1.bf16.msra.mxu0 0
    %164 = vmatprep.subr.bf16.mxu0 0
    %165 = vmatpush1.bf16.msra.mxu0 0
    %166 = vmatprep.subr.bf16.mxu0 0
    %167 = vmatpush1.bf16.msra.mxu0 0
    %168 = vmatprep.subr.bf16.mxu0 0
    %169 = vmatpush1.bf16.msra.mxu0 0
    %170 = vmatprep.subr.bf16.mxu0 0
    %171 = vmatpush1.bf16.msra.mxu0 0
    %172 = vmatprep.subr.bf16.mxu0 0
    %173 = vmatpush1.bf16.msra.mxu0 0
    %174 = vmatprep.subr.bf16.mxu0 0
    %175 = vmatpush1.bf16.msra.mxu0 0
    %176 = vmatprep.subr.bf16.mxu0 0
    %177 = vmatpush1.bf16.msra.mxu0 0
    %178 = vmatprep.subr.bf16.mxu0 0
    %179 = vmatpush1.bf16.msra.mxu0 0
    %180 = vmatprep.mubr.bf16.mxu0 0
    %181 = vmatmul.mubr.bf16.gmra.mrb[0].mxu0 %v140
    %v182 = vpop.f32.mrb[0].mxu0
    %v183 = vadd.f32 %v119, %v182
    %v184 = vpop.f32.mrb[0].mxu0
    %v185 = vpop.f32.mrb[0].mxu0
    %v186 = vadd.f32 %v119, %v185
    %v187 = vpop.f32.mrb[0].mxu0
    %188 = vdwg.mxu0
    %v189 = vld [vmem:[%s1 + $0x60] sm:$0xf]
    %v190 = vld [vmem:[%s1 + $0x64] sm:$0xf]
    %v191 = vld [vmem:[%s1 + $0x68] sm:$0xf]
    %v192 = vld [vmem:[%s1 + $0x6c] sm:$0xf]
    %v193 = vld [vmem:[%s2 + $0x2] sm:$0x1]
    %v194 = vlaneseq
    %v195 = vshrl.u32 %v194, 7
    %v196 = vsub.s32 0, %v195
    %v197 = vrot.slane %v193, %v196
    %v202 = vunpack.c.l.b16 %v189
    %v203 = vunpack.c.l.b16 %v190
    %v204 = vunpack.c.l.b16 %v191
    %v205 = vunpack.c.l.b16 %v192
    %v206 = vpack.c.b16 %v203, %v202
    %v207 = vpack.c.b16 %v205, %v204
    %vm210 = vcmask 261120
    %v212 = vsel %vm210, %v114, 0
    %214 = vmatprep.subr.bf16.mxu0 0
    %215 = vmatpush1.bf16.msra.mxu0 %v206
    %216 = vmatprep.subr.bf16.mxu0 0
    %217 = vmatpush1.bf16.msra.mxu0 %v207
    %218 = vmatprep.subr.bf16.mxu0 0
    %219 = vmatpush1.bf16.msra.mxu0 0
    %220 = vmatprep.subr.bf16.mxu0 0
    %221 = vmatpush1.bf16.msra.mxu0 0
    %222 = vmatprep.subr.bf16.mxu0 0
    %223 = vmatpush1.bf16.msra.mxu0 0
    %224 = vmatprep.subr.bf16.mxu0 0
    %225 = vmatpush1.bf16.msra.mxu0 0
    %226 = vmatprep.subr.bf16.mxu0 0
    %227 = vmatpush1.bf16.msra.mxu0 0
    %228 = vmatprep.subr.bf16.mxu0 0
    %229 = vmatpush1.bf16.msra.mxu0 0
    %230 = vmatprep.subr.bf16.mxu0 0
    %231 = vmatpush1.bf16.msra.mxu0 0
    %232 = vmatprep.subr.bf16.mxu0 0
    %233 = vmatpush1.bf16.msra.mxu0 0
    %234 = vmatprep.subr.bf16.mxu0 0
    %235 = vmatpush1.bf16.msra.mxu0 0
    %236 = vmatprep.subr.bf16.mxu0 0
    %237 = vmatpush1.bf16.msra.mxu0 0
    %238 = vmatprep.subr.bf16.mxu0 0
    %239 = vmatpush1.bf16.msra.mxu0 0
    %240 = vmatprep.subr.bf16.mxu0 0
    %241 = vmatpush1.bf16.msra.mxu0 0
    %242 = vmatprep.subr.bf16.mxu0 0
    %243 = vmatpush1.bf16.msra.mxu0 0
    %244 = vmatprep.subr.bf16.mxu0 0
    %245 = vmatpush1.bf16.msra.mxu0 0
    %246 = vmatprep.mubr.bf16.mxu0 0
    %247 = vmatmul.mubr.bf16.gmra.mrb[0].mxu0 %v212
    %v248 = vpop.f32.mrb[0].mxu0
    %v249 = vadd.f32 %v197, %v248
    %v250 = vpop.f32.mrb[0].mxu0
    %v251 = vpop.f32.mrb[0].mxu0
    %v252 = vadd.f32 %v197, %v251
    %v253 = vpop.f32.mrb[0].mxu0
    %254 = vdwg.mxu0
    %v255 = vxor.u32 %v249, 2147483648
    %v256 = vxor.u32 %v252, 2147483648
    %v257 = vmul.f32 %v255, 1.442695
    %v258 = vpow.pop %v257
    %v259 = vmul.f32 %v256, 1.442695
    %v260 = vpow.pop %v259
    %v261 = vadd.f32 %v258, 1.0
    %v262 = vadd.f32 %v260, 1.0
    %v263 = vrcp.pop %v261
    %v264 = vmul.f32 1.0, %v263
    %v265 = vrcp.pop %v262
    %v266 = vmul.f32 1.0, %v265
    %v267 = vmul.f32 %v249, %v264
    %v268 = vmul.f32 %v252, %v266
    %v269 = vld [vmem:[%s1 + $0x70] sm:$0xf]
    %v270 = vld [vmem:[%s1 + $0x74] sm:$0xf]
    %v271 = vld [vmem:[%s1 + $0x78] sm:$0xf]
    %v272 = vld [vmem:[%s1 + $0x7c] sm:$0xf]
    %v273 = vpack.c.bf16 %v268, %v267
    %v274 = vld [vmem:[%s2 + $0x3] sm:$0x1]
    %v275 = vlaneseq
    %v276 = vshrl.u32 %v275, 7
    %v277 = vsub.s32 0, %v276
    %v278 = vrot.slane %v274, %v277
    %v283 = vunpack.c.l.b16 %v269
    %v284 = vunpack.c.l.b16 %v270
    %v285 = vunpack.c.l.b16 %v271
    %v286 = vunpack.c.l.b16 %v272
    %v287 = vpack.c.b16 %v284, %v283
    %v288 = vpack.c.b16 %v286, %v285
    %v292 = vsel %vm210, %v273, 0
    %294 = vmatprep.subr.bf16.mxu0 0
    %295 = vmatpush1.bf16.msra.mxu0 %v287
    %296 = vmatprep.subr.bf16.mxu0 0
    %297 = vmatpush1.bf16.msra.mxu0 %v288
    %298 = vmatprep.subr.bf16.mxu0 0
    %299 = vmatpush1.bf16.msra.mxu0 0
    %300 = vmatprep.subr.bf16.mxu0 0
    %301 = vmatpush1.bf16.msra.mxu0 0
    %302 = vmatprep.subr.bf16.mxu0 0
    %303 = vmatpush1.bf16.msra.mxu0 0
    %304 = vmatprep.subr.bf16.mxu0 0
    %305 = vmatpush1.bf16.msra.mxu0 0
    %306 = vmatprep.subr.bf16.mxu0 0
    %307 = vmatpush1.bf16.msra.mxu0 0
    %308 = vmatprep.subr.bf16.mxu0 0
    %309 = vmatpush1.bf16.msra.mxu0 0
    %310 = vmatprep.subr.bf16.mxu0 0
    %311 = vmatpush1.bf16.msra.mxu0 0
    %312 = vmatprep.subr.bf16.mxu0 0
    %313 = vmatpush1.bf16.msra.mxu0 0
    %314 = vmatprep.subr.bf16.mxu0 0
    %315 = vmatpush1.bf16.msra.mxu0 0
    %316 = vmatprep.subr.bf16.mxu0 0
    %317 = vmatpush1.bf16.msra.mxu0 0
    %318 = vmatprep.subr.bf16.mxu0 0
    %319 = vmatpush1.bf16.msra.mxu0 0
    %320 = vmatprep.subr.bf16.mxu0 0
    %321 = vmatpush1.bf16.msra.mxu0 0
    %322 = vmatprep.subr.bf16.mxu0 0
    %323 = vmatpush1.bf16.msra.mxu0 0
    %324 = vmatprep.subr.bf16.mxu0 0
    %325 = vmatpush1.bf16.msra.mxu0 0
    %326 = vmatprep.mubr.bf16.mxu0 0
    %327 = vmatmul.mubr.bf16.gmra.mrb[0].mxu0 %v292
    %v328 = vpop.f32.mrb[0].mxu0
    %v329 = vadd.f32 %v278, %v328
    %v330 = vpop.f32.mrb[0].mxu0
    %v331 = vpop.f32.mrb[0].mxu0
    %v332 = vadd.f32 %v278, %v331
    %v333 = vpop.f32.mrb[0].mxu0
    %334 = vdwg.mxu0
    %v335 = vadd.f32 %v103, %v329
    %v336 = vadd.f32 %v106, %v332
    %v337 = vld [vmem:[%s1] sm:$0xf]
    %v338 = vld [vmem:[%s1 + $0x4] sm:$0xf]
    %v339 = vld [vmem:[%s1 + $0x8] sm:$0xf]
    %v340 = vld [vmem:[%s1 + $0xc] sm:$0xf]
    %v341 = vld [vmem:[%s1 + $0x10] sm:$0xf]
    %v342 = vld [vmem:[%s1 + $0x14] sm:$0xf]
    %v343 = vld [vmem:[%s1 + $0x18] sm:$0xf]
    %v344 = vld [vmem:[%s1 + $0x1c] sm:$0xf]
    %v345 = vld [vmem:[%s1 + $0x20] sm:$0xf]
    %v346 = vld [vmem:[%s1 + $0x24] sm:$0xf]
    %v347 = vld [vmem:[%s1 + $0x28] sm:$0xf]
    %v348 = vld [vmem:[%s1 + $0x2c] sm:$0xf]
    %v349 = vld [vmem:[%s1 + $0x30] sm:$0xf]
    %v350 = vld [vmem:[%s1 + $0x34] sm:$0xf]
    %v351 = vld [vmem:[%s1 + $0x38] sm:$0xf]
    %v352 = vld [vmem:[%s1 + $0x3c] sm:$0xf]
    %v353 = vsel %vm210, %v335, 0.0
    %354 = vadd.xlane.f32.xlu0 %v353
    %v355 = vpop.xlane.xlu0 %354
    %v356 = vsel %vm210, %v336, 0.0
    %357 = vadd.xlane.f32.xlu0 %v356
    %v358 = vpop.xlane.xlu0 %357
    %v359 = vrcp.pop 32.0
    %v360 = vmul.f32 %v355, %v359
    %v361 = vmul.f32 %v358, %v359
    %v362 = vsub.f32 %v335, %v360
    %v363 = vsub.f32 %v336, %v361
    %v364 = vmul.f32 %v362, %v362
    %v365 = vmul.f32 %v363, %v363
    %v366 = vsel %vm210, %v364, 0.0
    %367 = vadd.xlane.f32.xlu0 %v366
    %v368 = vpop.xlane.xlu0 %367
    %v369 = vsel %vm210, %v365, 0.0
    %370 = vadd.xlane.f32.xlu0 %v369
    %v371 = vpop.xlane.xlu0 %370
    %v372 = vmul.f32 %v368, %v359
    %v373 = vmul.f32 %v371, %v359
    %v374 = vadd.f32 %v372, 1e-05
    %v375 = vadd.f32 %v373, 1e-05
    %v376 = vrsqrt.pop %v374
    %v377 = vrsqrt.pop %v375
    %v378 = vmul.f32 %v362, %v376
    %v379 = vmul.f32 %v363, %v377
    %v380 = vld [vmem:[%s2 + $0x4] sm:$0x1]
    %v381 = vlaneseq
    %v382 = vshrl.u32 %v381, 7
    %v383 = vsub.s32 0, %v382
    %v384 = vrot.slane %v380, %v383
    %v385 = vmul.f32 %v378, %v384
    %v386 = vmul.f32 %v379, %v384
    %v387 = vld [vmem:[%s2 + $0x5] sm:$0x1]
    %v388 = vlaneseq
    %v389 = vshrl.u32 %v388, 7
    %v390 = vsub.s32 0, %v389
    %v391 = vrot.slane %v387, %v390
    %v392 = vadd.f32 %v385, %v391
    %v393 = vadd.f32 %v386, %v391
    %v394 = vld [vmem:[%s1 + $0x80] sm:$0xf]
    %v395 = vld [vmem:[%s1 + $0x84] sm:$0xf]
    %v396 = vld [vmem:[%s1 + $0x88] sm:$0xf]
    %v397 = vld [vmem:[%s1 + $0x8c] sm:$0xf]
    %v398 = vpack.c.bf16 %v393, %v392
    %v399 = vld [vmem:[%s2 + $0xa] sm:$0x1]
    %v400 = vlaneseq
    %v401 = vshrl.u32 %v400, 7
    %v402 = vsub.s32 0, %v401
    %v403 = vrot.slane %v399, %v402
    %v408 = vunpack.c.l.b16 %v394
    %v409 = vunpack.c.l.b16 %v395
    %v410 = vunpack.c.l.b16 %v396
    %v411 = vunpack.c.l.b16 %v397
    %v412 = vpack.c.b16 %v409, %v408
    %v413 = vpack.c.b16 %v411, %v410
    %v417 = vsel %vm210, %v398, 0
    %419 = vmatprep.subr.bf16.mxu0 0
    %420 = vmatpush1.bf16.msra.mxu0 %v412
    %421 = vmatprep.subr.bf16.mxu0 0
    %422 = vmatpush1.bf16.msra.mxu0 %v413
    %423 = vmatprep.subr.bf16.mxu0 0
    %424 = vmatpush1.bf16.msra.mxu0 0
    %425 = vmatprep.subr.bf16.mxu0 0
    %426 = vmatpush1.bf16.msra.mxu0 0
    %427 = vmatprep.subr.bf16.mxu0 0
    %428 = vmatpush1.bf16.msra.mxu0 0
    %429 = vmatprep.subr.bf16.mxu0 0
    %430 = vmatpush1.bf16.msra.mxu0 0
    %431 = vmatprep.subr.bf16.mxu0 0
    %432 = vmatpush1.bf16.msra.mxu0 0
    %433 = vmatprep.subr.bf16.mxu0 0
    %434 = vmatpush1.bf16.msra.mxu0 0
    %435 = vmatprep.subr.bf16.mxu0 0
    %436 = vmatpush1.bf16.msra.mxu0 0
    %437 = vmatprep.subr.bf16.mxu0 0
    %438 = vmatpush1.bf16.msra.mxu0 0
    %439 = vmatprep.subr.bf16.mxu0 0
    %440 = vmatpush1.bf16.msra.mxu0 0
    %441 = vmatprep.subr.bf16.mxu0 0
    %442 = vmatpush1.bf16.msra.mxu0 0
    %443 = vmatprep.subr.bf16.mxu0 0
    %444 = vmatpush1.bf16.msra.mxu0 0
    %445 = vmatprep.subr.bf16.mxu0 0
    %446 = vmatpush1.bf16.msra.mxu0 0
    %447 = vmatprep.subr.bf16.mxu0 0
    %448 = vmatpush1.bf16.msra.mxu0 0
    %449 = vmatprep.subr.bf16.mxu0 0
    %450 = vmatpush1.bf16.msra.mxu0 0
    %451 = vmatprep.mubr.bf16.mxu0 0
    %452 = vmatmul.mubr.bf16.gmra.mrb[0].mxu0 %v417
    %v453 = vpop.f32.mrb[0].mxu0
    %v454 = vadd.f32 %v403, %v453
    %v455 = vpop.f32.mrb[0].mxu0
    %v456 = vpop.f32.mrb[0].mxu0
    %v457 = vadd.f32 %v403, %v456
    %v458 = vpop.f32.mrb[0].mxu0
    %459 = vdwg.mxu0
    %v460 = vld [vmem:[%s1 + $0x90] sm:$0xf]
    %v461 = vld [vmem:[%s1 + $0x94] sm:$0xf]
    %v462 = vld [vmem:[%s1 + $0x98] sm:$0xf]
    %v463 = vld [vmem:[%s1 + $0x9c] sm:$0xf]
    %v464 = vld [vmem:[%s2 + $0xb] sm:$0x1]
    %v465 = vlaneseq
    %v466 = vshrl.u32 %v465, 7
    %v467 = vsub.s32 0, %v466
    %v468 = vrot.slane %v464, %v467
    %v473 = vunpack.c.l.b16 %v460
    %v474 = vunpack.c.l.b16 %v461
    %v475 = vunpack.c.l.b16 %v462
    %v476 = vunpack.c.l.b16 %v463
    %v477 = vpack.c.b16 %v474, %v473
    %v478 = vpack.c.b16 %v476, %v475
    %481 = vmatprep.subr.bf16.mxu0 0
    %482 = vmatpush1.bf16.msra.mxu0 %v477
    %483 = vmatprep.subr.bf16.mxu0 0
    %484 = vmatpush1.bf16.msra.mxu0 %v478
    %485 = vmatprep.subr.bf16.mxu0 0
    %486 = vmatpush1.bf16.msra.mxu0 0
    %487 = vmatprep.subr.bf16.mxu0 0
    %488 = vmatpush1.bf16.msra.mxu0 0
    %489 = vmatprep.subr.bf16.mxu0 0
    %490 = vmatpush1.bf16.msra.mxu0 0
    %491 = vmatprep.subr.bf16.mxu0 0
    %492 = vmatpush1.bf16.msra.mxu0 0
    %493 = vmatprep.subr.bf16.mxu0 0
    %494 = vmatpush1.bf16.msra.mxu0 0
    %495 = vmatprep.subr.bf16.mxu0 0
    %496 = vmatpush1.bf16.msra.mxu0 0
    %497 = vmatprep.subr.bf16.mxu0 0
    %498 = vmatpush1.bf16.msra.mxu0 0
    %499 = vmatprep.subr.bf16.mxu0 0
    %500 = vmatpush1.bf16.msra.mxu0 0
    %501 = vmatprep.subr.bf16.mxu0 0
    %502 = vmatpush1.bf16.msra.mxu0 0
    %503 = vmatprep.subr.bf16.mxu0 0
    %504 = vmatpush1.bf16.msra.mxu0 0
    %505 = vmatprep.subr.bf16.mxu0 0
    %506 = vmatpush1.bf16.msra.mxu0 0
    %507 = vmatprep.subr.bf16.mxu0 0
    %508 = vmatpush1.bf16.msra.mxu0 0
    %509 = vmatprep.subr.bf16.mxu0 0
    %510 = vmatpush1.bf16.msra.mxu0 0
    %511 = vmatprep.subr.bf16.mxu0 0
    %512 = vmatpush1.bf16.msra.mxu0 0
    %513 = vmatprep.mubr.bf16.mxu0 0
    %514 = vmatmul.mubr.bf16.gmra.mrb[0].mxu0 %v417
    %v515 = vpop.f32.mrb[0].mxu0
    %v516 = vadd.f32 %v468, %v515
    %v517 = vpop.f32.mrb[0].mxu0
    %v518 = vpop.f32.mrb[0].mxu0
    %v519 = vadd.f32 %v468, %v518
    %v520 = vpop.f32.mrb[0].mxu0
    %521 = vdwg.mxu0
    %v522 = vmul.f32 %v454, %v516
    %v523 = vmul.f32 %v454, %v519
    %v524 = vmul.f32 %v457, %v516
    %v525 = vmul.f32 %v457, %v519
    %v526 = vpack.c.bf16 %v523, %v522
    %v527 = vpack.c.bf16 %v525, %v524
    %v536 = vunpack.c.l.b16 %v337
    %v537 = vunpack.c.l.b16 %v338
    %v538 = vunpack.c.l.b16 %v339
    %v539 = vunpack.c.l.b16 %v340
    %v540 = vunpack.c.l.b16 %v341
    %v541 = vunpack.c.l.b16 %v342
    %v542 = vunpack.c.l.b16 %v343
    %v543 = vunpack.c.l.b16 %v344
    %v544 = vpack.c.b16 %v537, %v536
    %v545 = vpack.c.b16 %v539, %v538
    %v546 = vpack.c.b16 %v541, %v540
    %v547 = vpack.c.b16 %v543, %v542
    %vm552 = vcmask 523264
    %v554 = vsel %vm552, %v526, 0
    %v557 = vsel %vm552, %v527, 0
    %559 = vmatprep.subr.bf16.mxu0 0
    %560 = vmatpush1.bf16.msra.mxu0 %v544
    %561 = vmatprep.subr.bf16.mxu0 0
    %562 = vmatpush1.bf16.msra.mxu0 %v545
    %563 = vmatprep.subr.bf16.mxu0 0
    %564 = vmatpush1.bf16.msra.mxu0 %v546
    %565 = vmatprep.subr.bf16.mxu0 0
    %566 = vmatpush1.bf16.msra.mxu0 %v547
    %567 = vmatprep.subr.bf16.mxu0 0
    %568 = vmatpush1.bf16.msra.mxu0 0
    %569 = vmatprep.subr.bf16.mxu0 0
    %570 = vmatpush1.bf16.msra.mxu0 0
    %571 = vmatprep.subr.bf16.mxu0 0
    %572 = vmatpush1.bf16.msra.mxu0 0
    %573 = vmatprep.subr.bf16.mxu0 0
    %574 = vmatpush1.bf16.msra.mxu0 0
    %575 = vmatprep.subr.bf16.mxu0 0
    %576 = vmatpush1.bf16.msra.mxu0 0
    %577 = vmatprep.subr.bf16.mxu0 0
    %578 = vmatpush1.bf16.msra.mxu0 0
    %579 = vmatprep.subr.bf16.mxu0 0
    %580 = vmatpush1.bf16.msra.mxu0 0
    %581 = vmatprep.subr.bf16.mxu0 0
    %582 = vmatpush1.bf16.msra.mxu0 0
    %583 = vmatprep.subr.bf16.mxu0 0
    %584 = vmatpush1.bf16.msra.mxu0 0
    %585 = vmatprep.subr.bf16.mxu0 0
    %586 = vmatpush1.bf16.msra.mxu0 0
    %587 = vmatprep.subr.bf16.mxu0 0
    %588 = vmatpush1.bf16.msra.mxu0 0
    %589 = vmatprep.subr.bf16.mxu0 0
    %590 = vmatpush1.bf16.msra.mxu0 0
    %591 = vmatprep.mubr.bf16.mxu0 0
    %592 = vmatmul.mubr.bf16.gmra.mrb[0].mxu0 %v554
    %v593 = vpop.f32.mrb[0].mxu0
    %v594 = vadd.f32 0.0, %v593
    %v595 = vpop.f32.mrb[0].mxu0
    %v596 = vpop.f32.mrb[0].mxu0
    %v597 = vadd.f32 0.0, %v596
    %v598 = vpop.f32.mrb[0].mxu0
    %599 = vmatprep.mubr.bf16.mxu0 0
    %600 = vmatmul.mubr.bf16.gmra.mrb[0].mxu0 %v557
    %v601 = vpop.f32.mrb[0].mxu0
    %v602 = vadd.f32 0.0, %v601
    %v603 = vpop.f32.mrb[0].mxu0
    %v604 = vpop.f32.mrb[0].mxu0
    %v605 = vadd.f32 0.0, %v604
    %v606 = vpop.f32.mrb[0].mxu0
    %607 = vdwg.mxu0
    %v608 = vmax.f32 %v594, %v597
    %v609 = vsub.f32 %v594, %v608
    %v610 = vmul.f32 %v609, 1.442695
    %v611 = vpow.pop %v610
    %v612 = vsub.f32 %v597, %v608
    %v613 = vmul.f32 %v612, 1.442695
    %v614 = vpow.pop %v613
    %v615 = vadd.f32 %v611, %v614
    %v616 = vrcp.pop %v615
    %v617 = vmul.f32 %v611, %v616
    %v618 = vmul.f32 %v617, %v516
    %v619 = vmul.f32 %v614, %v616
    %v620 = vmul.f32 %v619, %v519
    %v621 = vadd.f32 %v618, %v620
    %v622 = vmax.f32 %v602, %v605
    %v623 = vsub.f32 %v602, %v622
    %v624 = vmul.f32 %v623, 1.442695
    %v625 = vpow.pop %v624
    %v626 = vsub.f32 %v605, %v622
    %v627 = vmul.f32 %v626, 1.442695
    %v628 = vpow.pop %v627
    %v629 = vadd.f32 %v625, %v628
    %v630 = vrcp.pop %v629
    %v631 = vmul.f32 %v625, %v630
    %v632 = vmul.f32 %v631, %v516
    %v633 = vmul.f32 %v628, %v630
    %v634 = vmul.f32 %v633, %v519
    %v635 = vadd.f32 %v632, %v634
    %v636 = vld [vmem:[%s1 + $0xa0] sm:$0xf]
    %v637 = vld [vmem:[%s1 + $0xa4] sm:$0xf]
    %v638 = vld [vmem:[%s1 + $0xa8] sm:$0xf]
    %v639 = vld [vmem:[%s1 + $0xac] sm:$0xf]
    %v640 = vld [vmem:[%s1 + $0xb0] sm:$0xf]
    %v641 = vld [vmem:[%s1 + $0xb4] sm:$0xf]
    %v642 = vld [vmem:[%s1 + $0xb8] sm:$0xf]
    %v643 = vld [vmem:[%s1 + $0xbc] sm:$0xf]
    %v644 = vpack.c.bf16 %v635, %v621
    %v653 = vunpack.c.l.b16 %v636
    %v654 = vunpack.c.l.b16 %v637
    %v655 = vunpack.c.l.b16 %v638
    %v656 = vunpack.c.l.b16 %v639
    %v657 = vunpack.c.l.b16 %v640
    %v658 = vunpack.c.l.b16 %v641
    %v659 = vunpack.c.l.b16 %v642
    %v660 = vunpack.c.l.b16 %v643
    %v661 = vpack.c.b16 %v654, %v653
    %v662 = vpack.c.b16 %v656, %v655
    %v663 = vpack.c.b16 %v658, %v657
    %v664 = vpack.c.b16 %v660, %v659
    %v670 = vsel %vm552, %v644, 0
    %672 = vmatprep.subr.bf16.mxu0 0
    %673 = vmatpush1.bf16.msra.mxu0 %v661
    %674 = vmatprep.subr.bf16.mxu0 0
    %675 = vmatpush1.bf16.msra.mxu0 %v662
    %676 = vmatprep.subr.bf16.mxu0 0
    %677 = vmatpush1.bf16.msra.mxu0 %v663
    %678 = vmatprep.subr.bf16.mxu0 0
    %679 = vmatpush1.bf16.msra.mxu0 %v664
    %680 = vmatprep.subr.bf16.mxu0 0
    %681 = vmatpush1.bf16.msra.mxu0 0
    %682 = vmatprep.subr.bf16.mxu0 0
    %683 = vmatpush1.bf16.msra.mxu0 0
    %684 = vmatprep.subr.bf16.mxu0 0
    %685 = vmatpush1.bf16.msra.mxu0 0
    %686 = vmatprep.subr.bf16.mxu0 0
    %687 = vmatpush1.bf16.msra.mxu0 0
    %688 = vmatprep.subr.bf16.mxu0 0
    %689 = vmatpush1.bf16.msra.mxu0 0
    %690 = vmatprep.subr.bf16.mxu0 0
    %691 = vmatpush1.bf16.msra.mxu0 0
    %692 = vmatprep.subr.bf16.mxu0 0
    %693 = vmatpush1.bf16.msra.mxu0 0
    %694 = vmatprep.subr.bf16.mxu0 0
    %695 = vmatpush1.bf16.msra.mxu0 0
    %696 = vmatprep.subr.bf16.mxu0 0
    %697 = vmatpush1.bf16.msra.mxu0 0
    %698 = vmatprep.subr.bf16.mxu0 0
    %699 = vmatpush1.bf16.msra.mxu0 0
    %700 = vmatprep.subr.bf16.mxu0 0
    %701 = vmatpush1.bf16.msra.mxu0 0
    %702 = vmatprep.subr.bf16.mxu0 0
    %703 = vmatpush1.bf16.msra.mxu0 0
    %704 = vmatprep.mubr.bf16.mxu0 0
    %705 = vmatmul.mubr.bf16.gmra.mrb[0].mxu0 %v670
    %v706 = vpop.f32.mrb[0].mxu0
    %v707 = vadd.f32 0.0, %v706
    %v708 = vpop.f32.mrb[0].mxu0
    %v709 = vpop.f32.mrb[0].mxu0
    %v710 = vadd.f32 0.0, %v709
    %v711 = vpop.f32.mrb[0].mxu0
    %712 = vdwg.mxu0
    %v713 = vadd.f32 %v335, %v707
    %v714 = vadd.f32 %v336, %v710
    %v715 = vld [vmem:[%s2 + $0xc] sm:$0x1]
    %v716 = vlaneseq
    %v717 = vshrl.u32 %v716, 7
    %v718 = vsub.s32 0, %v717
    %v719 = vrot.slane %v715, %v718
    %v720 = vadd.f32 %v713, %v719
    %v721 = vadd.f32 %v714, %v719
    %v722 = vsel %vm210, %v720, 0.0
    %723 = vadd.xlane.f32.xlu0 %v722
    %v724 = vpop.xlane.xlu0 %723
    %v725 = vsel %vm210, %v721, 0.0
    %726 = vadd.xlane.f32.xlu0 %v725
    %v727 = vpop.xlane.xlu0 %726
    %v728 = vmul.f32 %v724, %v359
    %v729 = vmul.f32 %v727, %v359
    %v730 = vsub.f32 %v720, %v728
    %v731 = vsub.f32 %v721, %v729
    %v732 = vmul.f32 %v730, %v730
    %v733 = vmul.f32 %v731, %v731
    %v734 = vsel %vm210, %v732, 0.0
    %735 = vadd.xlane.f32.xlu0 %v734
    %v736 = vpop.xlane.xlu0 %735
    %v737 = vsel %vm210, %v733, 0.0
    %738 = vadd.xlane.f32.xlu0 %v737
    %v739 = vpop.xlane.xlu0 %738
    %v740 = vmul.f32 %v736, %v359
    %v741 = vmul.f32 %v739, %v359
    %v742 = vadd.f32 %v740, 1e-05
    %v743 = vadd.f32 %v741, 1e-05
    %v744 = vrsqrt.pop %v742
    %v745 = vrsqrt.pop %v743
    %v746 = vmul.f32 %v730, %v744
    %v747 = vmul.f32 %v731, %v745
    %v748 = vld [vmem:[%s2 + $0x6] sm:$0x1]
    %v749 = vlaneseq
    %v750 = vshrl.u32 %v749, 7
    %v751 = vsub.s32 0, %v750
    %v752 = vrot.slane %v748, %v751
    %v753 = vmul.f32 %v746, %v752
    %v754 = vmul.f32 %v747, %v752
    %v755 = vld [vmem:[%s2 + $0x7] sm:$0x1]
    %v756 = vlaneseq
    %v757 = vshrl.u32 %v756, 7
    %v758 = vsub.s32 0, %v757
    %v759 = vrot.slane %v755, %v758
    %v760 = vadd.f32 %v753, %v759
    %v761 = vadd.f32 %v754, %v759
    %v762 = vld [vmem:[%s1 + $0xc0] sm:$0xf]
    %v763 = vld [vmem:[%s1 + $0xc4] sm:$0xf]
    %v764 = vld [vmem:[%s1 + $0xc8] sm:$0xf]
    %v765 = vld [vmem:[%s1 + $0xcc] sm:$0xf]
    %v766 = vpack.c.bf16 %v761, %v760
    %v767 = vld [vmem:[%s2 + $0xd] sm:$0x1]
    %v768 = vlaneseq
    %v769 = vshrl.u32 %v768, 7
    %v770 = vsub.s32 0, %v769
    %v771 = vrot.slane %v767, %v770
    %v776 = vunpack.c.l.b16 %v762
    %v777 = vunpack.c.l.b16 %v763
    %v778 = vunpack.c.l.b16 %v764
    %v779 = vunpack.c.l.b16 %v765
    %v780 = vpack.c.b16 %v777, %v776
    %v781 = vpack.c.b16 %v779, %v778
    %v785 = vsel %vm210, %v766, 0
    %787 = vmatprep.subr.bf16.mxu0 0
    %788 = vmatpush1.bf16.msra.mxu0 %v780
    %789 = vmatprep.subr.bf16.mxu0 0
    %790 = vmatpush1.bf16.msra.mxu0 %v781
    %791 = vmatprep.subr.bf16.mxu0 0
    %792 = vmatpush1.bf16.msra.mxu0 0
    %793 = vmatprep.subr.bf16.mxu0 0
    %794 = vmatpush1.bf16.msra.mxu0 0
    %795 = vmatprep.subr.bf16.mxu0 0
    %796 = vmatpush1.bf16.msra.mxu0 0
    %797 = vmatprep.subr.bf16.mxu0 0
    %798 = vmatpush1.bf16.msra.mxu0 0
    %799 = vmatprep.subr.bf16.mxu0 0
    %800 = vmatpush1.bf16.msra.mxu0 0
    %801 = vmatprep.subr.bf16.mxu0 0
    %802 = vmatpush1.bf16.msra.mxu0 0
    %803 = vmatprep.subr.bf16.mxu0 0
    %804 = vmatpush1.bf16.msra.mxu0 0
    %805 = vmatprep.subr.bf16.mxu0 0
    %806 = vmatpush1.bf16.msra.mxu0 0
    %807 = vmatprep.subr.bf16.mxu0 0
    %808 = vmatpush1.bf16.msra.mxu0 0
    %809 = vmatprep.subr.bf16.mxu0 0
    %810 = vmatpush1.bf16.msra.mxu0 0
    %811 = vmatprep.subr.bf16.mxu0 0
    %812 = vmatpush1.bf16.msra.mxu0 0
    %813 = vmatprep.subr.bf16.mxu0 0
    %814 = vmatpush1.bf16.msra.mxu0 0
    %815 = vmatprep.subr.bf16.mxu0 0
    %816 = vmatpush1.bf16.msra.mxu0 0
    %817 = vmatprep.subr.bf16.mxu0 0
    %818 = vmatpush1.bf16.msra.mxu0 0
    %819 = vmatprep.mubr.bf16.mxu0 0
    %820 = vmatmul.mubr.bf16.gmra.mrb[0].mxu0 %v785
    %v821 = vpop.f32.mrb[0].mxu0
    %v822 = vadd.f32 %v771, %v821
    %v823 = vpop.f32.mrb[0].mxu0
    %v824 = vpop.f32.mrb[0].mxu0
    %v825 = vadd.f32 %v771, %v824
    %v826 = vpop.f32.mrb[0].mxu0
    %827 = vdwg.mxu0
    %v828 = vld [vmem:[%s1 + $0xd0] sm:$0xf]
    %v829 = vld [vmem:[%s1 + $0xd4] sm:$0xf]
    %v830 = vld [vmem:[%s1 + $0xd8] sm:$0xf]
    %v831 = vld [vmem:[%s1 + $0xdc] sm:$0xf]
    %v832 = vld [vmem:[%s1 + $0xe0] sm:$0xf]
    %v833 = vld [vmem:[%s1 + $0xe4] sm:$0xf]
    %v834 = vld [vmem:[%s1 + $0xe8] sm:$0xf]
    %v835 = vld [vmem:[%s1 + $0xec] sm:$0xf]
    %v836 = vpack.c.bf16 %v186, %v183
    %v837 = vld [vmem:[%s2 + $0xe] sm:$0x1]
    %v838 = vlaneseq
    %v839 = vshrl.u32 %v838, 7
    %v840 = vsub.s32 0, %v839
    %v841 = vrot.slane %v837, %v840
    %v850 = vunpack.c.l.b16 %v828
    %v851 = vunpack.c.l.b16 %v829
    %v852 = vunpack.c.l.b16 %v830
    %v853 = vunpack.c.l.b16 %v831
    %v854 = vunpack.c.l.b16 %v832
    %v855 = vunpack.c.l.b16 %v833
    %v856 = vunpack.c.l.b16 %v834
    %v857 = vunpack.c.l.b16 %v835
    %v858 = vpack.c.b16 %v851, %v850
    %v859 = vpack.c.b16 %v853, %v852
    %v860 = vpack.c.b16 %v855, %v854
    %v861 = vpack.c.b16 %v857, %v856
    %v867 = vsel %vm552, %v836, 0
    %869 = vmatprep.subr.bf16.mxu0 0
    %870 = vmatpush1.bf16.msra.mxu0 %v858
    %871 = vmatprep.subr.bf16.mxu0 0
    %872 = vmatpush1.bf16.msra.mxu0 %v859
    %873 = vmatprep.subr.bf16.mxu0 0
    %874 = vmatpush1.bf16.msra.mxu0 %v860
    %875 = vmatprep.subr.bf16.mxu0 0
    %876 = vmatpush1.bf16.msra.mxu0 %v861
    %877 = vmatprep.subr.bf16.mxu0 0
    %878 = vmatpush1.bf16.msra.mxu0 0
    %879 = vmatprep.subr.bf16.mxu0 0
    %880 = vmatpush1.bf16.msra.mxu0 0
    %881 = vmatprep.subr.bf16.mxu0 0
    %882 = vmatpush1.bf16.msra.mxu0 0
    %883 = vmatprep.subr.bf16.mxu0 0
    %884 = vmatpush1.bf16.msra.mxu0 0
    %885 = vmatprep.subr.bf16.mxu0 0
    %886 = vmatpush1.bf16.msra.mxu0 0
    %887 = vmatprep.subr.bf16.mxu0 0
    %888 = vmatpush1.bf16.msra.mxu0 0
    %889 = vmatprep.subr.bf16.mxu0 0
    %890 = vmatpush1.bf16.msra.mxu0 0
    %891 = vmatprep.subr.bf16.mxu0 0
    %892 = vmatpush1.bf16.msra.mxu0 0
    %893 = vmatprep.subr.bf16.mxu0 0
    %894 = vmatpush1.bf16.msra.mxu0 0
    %895 = vmatprep.subr.bf16.mxu0 0
    %896 = vmatpush1.bf16.msra.mxu0 0
    %897 = vmatprep.subr.bf16.mxu0 0
    %898 = vmatpush1.bf16.msra.mxu0 0
    %899 = vmatprep.subr.bf16.mxu0 0
    %900 = vmatpush1.bf16.msra.mxu0 0
    %901 = vmatprep.mubr.bf16.mxu0 0
    %902 = vmatmul.mubr.bf16.gmra.mrb[0].mxu0 %v867
    %v903 = vpop.f32.mrb[0].mxu0
    %v904 = vadd.f32 %v841, %v903
    %v905 = vpop.f32.mrb[0].mxu0
    %v906 = vpop.f32.mrb[0].mxu0
    %v907 = vadd.f32 %v841, %v906
    %v908 = vpop.f32.mrb[0].mxu0
    %909 = vdwg.mxu0
    %v910 = vmul.f32 %v822, %v904
    %v911 = vmul.f32 %v822, %v907
    %v912 = vmul.f32 %v825, %v904
    %v913 = vmul.f32 %v825, %v907
    %v914 = vpack.c.bf16 %v911, %v910
    %v915 = vpack.c.bf16 %v913, %v912
    %v924 = vunpack.c.l.b16 %v345
    %v925 = vunpack.c.l.b16 %v346
    %v926 = vunpack.c.l.b16 %v347
    %v927 = vunpack.c.l.b16 %v348
    %v928 = vunpack.c.l.b16 %v349
    %v929 = vunpack.c.l.b16 %v350
    %v930 = vunpack.c.l.b16 %v351
    %v931 = vunpack.c.l.b16 %v352
    %v932 = vpack.c.b16 %v925, %v924
    %v933 = vpack.c.b16 %v927, %v926
    %v934 = vpack.c.b16 %v929, %v928
    %v935 = vpack.c.b16 %v931, %v930
    %940 = vmatprep.subr.bf16.mxu0 0
    %941 = vmatpush1.bf16.msra.mxu0 %v544
    %942 = vmatprep.subr.bf16.mxu0 0
    %943 = vmatpush1.bf16.msra.mxu0 %v545
    %944 = vmatprep.subr.bf16.mxu0 0
    %945 = vmatpush1.bf16.msra.mxu0 %v546
    %946 = vmatprep.subr.bf16.mxu0 0
    %947 = vmatpush1.bf16.msra.mxu0 %v547
    %948 = vmatprep.subr.bf16.mxu0 0
    %949 = vmatpush1.bf16.msra.mxu0 %v932
    %950 = vmatprep.subr.bf16.mxu0 0
    %951 = vmatpush1.bf16.msra.mxu0 %v933
    %952 = vmatprep.subr.bf16.mxu0 0
    %953 = vmatpush1.bf16.msra.mxu0 %v934
    %954 = vmatprep.subr.bf16.mxu0 0
    %955 = vmatpush1.bf16.msra.mxu0 %v935
    %956 = vmatprep.subr.bf16.mxu0 0
    %957 = vmatpush1.bf16.msra.mxu0 0
    %958 = vmatprep.subr.bf16.mxu0 0
    %959 = vmatpush1.bf16.msra.mxu0 0
    %960 = vmatprep.subr.bf16.mxu0 0
    %961 = vmatpush1.bf16.msra.mxu0 0
    %962 = vmatprep.subr.bf16.mxu0 0
    %963 = vmatpush1.bf16.msra.mxu0 0
    %964 = vmatprep.subr.bf16.mxu0 0
    %965 = vmatpush1.bf16.msra.mxu0 0
    %966 = vmatprep.subr.bf16.mxu0 0
    %967 = vmatpush1.bf16.msra.mxu0 0
    %968 = vmatprep.subr.bf16.mxu0 0
    %969 = vmatpush1.bf16.msra.mxu0 0
    %970 = vmatprep.subr.bf16.mxu0 0
    %971 = vmatpush1.bf16.msra.mxu0 0
    %972 = vmatprep.mubr.bf16.mxu0 0
    %973 = vmatmul.mubr.bf16.gmra.mrb[0].mxu0 %v914
    %v974 = vpop.f32.mrb[0].mxu0
    %v975 = vadd.f32 0.0, %v974
    %v976 = vpop.f32.mrb[0].mxu0
    %v977 = vpop.f32.mrb[0].mxu0
    %v978 = vadd.f32 0.0, %v977
    %v979 = vpop.f32.mrb[0].mxu0
    %980 = vmatprep.mubr.bf16.mxu0 0
    %981 = vmatmul.mubr.bf16.gmra.mrb[0].mxu0 %v915
    %v982 = vpop.f32.mrb[0].mxu0
    %v983 = vadd.f32 0.0, %v982
    %v984 = vpop.f32.mrb[0].mxu0
    %v985 = vpop.f32.mrb[0].mxu0
    %v986 = vadd.f32 0.0, %v985
    %v987 = vpop.f32.mrb[0].mxu0
    %988 = vdwg.mxu0
    %v989 = vmax.f32 %v975, %v978
    %v990 = vsub.f32 %v975, %v989
    %v991 = vmul.f32 %v990, 1.442695
    %v992 = vpow.pop %v991
    %v993 = vsub.f32 %v978, %v989
    %v994 = vmul.f32 %v993, 1.442695
    %v995 = vpow.pop %v994
    %v996 = vadd.f32 %v992, %v995
    %v997 = vrcp.pop %v996
    %v998 = vmul.f32 %v992, %v997
    %v999 = vmul.f32 %v998, %v904
    %v1000 = vmul.f32 %v995, %v997
    %v1001 = vmul.f32 %v1000, %v907
    %v1002 = vadd.f32 %v999, %v1001
    %v1003 = vmax.f32 %v983, %v986
    %v1004 = vsub.f32 %v983, %v1003
    %v1005 = vmul.f32 %v1004, 1.442695
    %v1006 = vpow.pop %v1005
    %v1007 = vsub.f32 %v986, %v1003
    %v1008 = vmul.f32 %v1007, 1.442695
    %v1009 = vpow.pop %v1008
    %v1010 = vadd.f32 %v1006, %v1009
    %v1011 = vrcp.pop %v1010
    %v1012 = vmul.f32 %v1006, %v1011
    %v1013 = vmul.f32 %v1012, %v904
    %v1014 = vmul.f32 %v1009, %v1011
    %v1015 = vmul.f32 %v1014, %v907
    %v1016 = vadd.f32 %v1013, %v1015
    %v1017 = vld [vmem:[%s1 + $0xf0] sm:$0xf]
    %v1018 = vld [vmem:[%s1 + $0xf4] sm:$0xf]
    %v1019 = vld [vmem:[%s1 + $0xf8] sm:$0xf]
    %v1020 = vld [vmem:[%s1 + $0xfc] sm:$0xf]
    %v1021 = vld [vmem:[%s1 + $0x100] sm:$0xf]
    %v1022 = vld [vmem:[%s1 + $0x104] sm:$0xf]
    %v1023 = vld [vmem:[%s1 + $0x108] sm:$0xf]
    %v1024 = vld [vmem:[%s1 + $0x10c] sm:$0xf]
    %v1025 = vld [vmem:[%s1 + $0x110] sm:$0xf]
    %v1026 = vld [vmem:[%s1 + $0x114] sm:$0xf]
    %v1027 = vld [vmem:[%s1 + $0x118] sm:$0xf]
    %v1028 = vld [vmem:[%s1 + $0x11c] sm:$0xf]
    %v1029 = vld [vmem:[%s1 + $0x120] sm:$0xf]
    %v1030 = vld [vmem:[%s1 + $0x124] sm:$0xf]
    %v1031 = vld [vmem:[%s1 + $0x128] sm:$0xf]
    %v1032 = vld [vmem:[%s1 + $0x12c] sm:$0xf]
    %v1033 = vpack.c.bf16 %v1016, %v1002
    %v1050 = vunpack.c.l.b16 %v1017
    %v1051 = vunpack.c.l.b16 %v1018
    %v1052 = vunpack.c.l.b16 %v1019
    %v1053 = vunpack.c.l.b16 %v1020
    %v1054 = vunpack.c.l.b16 %v1021
    %v1055 = vunpack.c.l.b16 %v1022
    %v1056 = vunpack.c.l.b16 %v1023
    %v1057 = vunpack.c.l.b16 %v1024
    %v1058 = vunpack.c.l.b16 %v1025
    %v1059 = vunpack.c.l.b16 %v1026
    %v1060 = vunpack.c.l.b16 %v1027
    %v1061 = vunpack.c.l.b16 %v1028
    %v1062 = vunpack.c.l.b16 %v1029
    %v1063 = vunpack.c.l.b16 %v1030
    %v1064 = vunpack.c.l.b16 %v1031
    %v1065 = vunpack.c.l.b16 %v1032
    %v1066 = vpack.c.b16 %v1051, %v1050
    %v1067 = vpack.c.b16 %v1053, %v1052
    %v1068 = vpack.c.b16 %v1055, %v1054
    %v1069 = vpack.c.b16 %v1057, %v1056
    %v1070 = vpack.c.b16 %v1059, %v1058
    %v1071 = vpack.c.b16 %v1061, %v1060
    %v1072 = vpack.c.b16 %v1063, %v1062
    %v1073 = vpack.c.b16 %v1065, %v1064
    %1082 = vmatprep.subr.bf16.mxu0 0
    %1083 = vmatpush1.bf16.msra.mxu0 %v1066
    %1084 = vmatprep.subr.bf16.mxu0 0
    %1085 = vmatpush1.bf16.msra.mxu0 %v1067
    %1086 = vmatprep.subr.bf16.mxu0 0
    %1087 = vmatpush1.bf16.msra.mxu0 %v1068
    %1088 = vmatprep.subr.bf16.mxu0 0
    %1089 = vmatpush1.bf16.msra.mxu0 %v1069
    %1090 = vmatprep.subr.bf16.mxu0 0
    %1091 = vmatpush1.bf16.msra.mxu0 %v1070
    %1092 = vmatprep.subr.bf16.mxu0 0
    %1093 = vmatpush1.bf16.msra.mxu0 %v1071
    %1094 = vmatprep.subr.bf16.mxu0 0
    %1095 = vmatpush1.bf16.msra.mxu0 %v1072
    %1096 = vmatprep.subr.bf16.mxu0 0
    %1097 = vmatpush1.bf16.msra.mxu0 %v1073
    %1098 = vmatprep.subr.bf16.mxu0 0
    %1099 = vmatpush1.bf16.msra.mxu0 0
    %1100 = vmatprep.subr.bf16.mxu0 0
    %1101 = vmatpush1.bf16.msra.mxu0 0
    %1102 = vmatprep.subr.bf16.mxu0 0
    %1103 = vmatpush1.bf16.msra.mxu0 0
    %1104 = vmatprep.subr.bf16.mxu0 0
    %1105 = vmatpush1.bf16.msra.mxu0 0
    %1106 = vmatprep.subr.bf16.mxu0 0
    %1107 = vmatpush1.bf16.msra.mxu0 0
    %1108 = vmatprep.subr.bf16.mxu0 0
    %1109 = vmatpush1.bf16.msra.mxu0 0
    %1110 = vmatprep.subr.bf16.mxu0 0
    %1111 = vmatpush1.bf16.msra.mxu0 0
    %1112 = vmatprep.subr.bf16.mxu0 0
    %1113 = vmatpush1.bf16.msra.mxu0 0
    %1114 = vmatprep.mubr.bf16.mxu0 0
    %1115 = vmatmul.mubr.bf16.gmra.mrb[0].mxu0 %v1033
    %v1116 = vpop.f32.mrb[0].mxu0
    %v1117 = vadd.f32 0.0, %v1116
    %v1118 = vpop.f32.mrb[0].mxu0
    %v1119 = vpop.f32.mrb[0].mxu0
    %v1120 = vadd.f32 0.0, %v1119
    %v1121 = vpop.f32.mrb[0].mxu0
    %1122 = vdwg.mxu0
    %v1123 = vadd.f32 %v720, %v1117
    %v1124 = vadd.f32 %v721, %v1120
    %v1125 = vld [vmem:[%s2 + $0xf] sm:$0x1]
    %v1126 = vlaneseq
    %v1127 = vshrl.u32 %v1126, 7
    %v1128 = vsub.s32 0, %v1127
    %v1129 = vrot.slane %v1125, %v1128
    %v1130 = vadd.f32 %v1123, %v1129
    %v1131 = vadd.f32 %v1124, %v1129
    %v1132 = vsel %vm210, %v1130, 0.0
    %1133 = vadd.xlane.f32.xlu0 %v1132
    %v1134 = vpop.xlane.xlu0 %1133
    %v1135 = vsel %vm210, %v1131, 0.0
    %1136 = vadd.xlane.f32.xlu0 %v1135
    %v1137 = vpop.xlane.xlu0 %1136
    %v1138 = vmul.f32 %v1134, %v359
    %v1139 = vmul.f32 %v1137, %v359
    %v1140 = vsub.f32 %v1130, %v1138
    %v1141 = vsub.f32 %v1131, %v1139
    %v1142 = vmul.f32 %v1140, %v1140
    %v1143 = vmul.f32 %v1141, %v1141
    %v1144 = vsel %vm210, %v1142, 0.0
    %1145 = vadd.xlane.f32.xlu0 %v1144
    %v1146 = vpop.xlane.xlu0 %1145
    %v1147 = vsel %vm210, %v1143, 0.0
    %1148 = vadd.xlane.f32.xlu0 %v1147
    %v1149 = vpop.xlane.xlu0 %1148
    %v1150 = vmul.f32 %v1146, %v359
    %v1151 = vmul.f32 %v1149, %v359
    %v1152 = vadd.f32 %v1150, 1e-05
    %v1153 = vadd.f32 %v1151, 1e-05
    %v1154 = vrsqrt.pop %v1152
    %v1155 = vrsqrt.pop %v1153
    %v1156 = vmul.f32 %v1140, %v1154
    %v1157 = vmul.f32 %v1141, %v1155
    %v1158 = vld [vmem:[%s2 + $0x8] sm:$0x1]
    %v1159 = vlaneseq
    %v1160 = vshrl.u32 %v1159, 7
    %v1161 = vsub.s32 0, %v1160
    %v1162 = vrot.slane %v1158, %v1161
    %v1163 = vmul.f32 %v1156, %v1162
    %v1164 = vmul.f32 %v1157, %v1162
    %v1165 = vld [vmem:[%s2 + $0x9] sm:$0x1]
    %v1166 = vlaneseq
    %v1167 = vshrl.u32 %v1166, 7
    %v1168 = vsub.s32 0, %v1167
    %v1169 = vrot.slane %v1165, %v1168
    %v1170 = vadd.f32 %v1163, %v1169
    %v1171 = vadd.f32 %v1164, %v1169
    %v1172 = vld [vmem:[%s1 + $0x130] sm:$0xf]
    %v1173 = vld [vmem:[%s1 + $0x134] sm:$0xf]
    %v1174 = vld [vmem:[%s1 + $0x138] sm:$0xf]
    %v1175 = vld [vmem:[%s1 + $0x13c] sm:$0xf]
    %v1176 = vpack.c.bf16 %v1171, %v1170
    %v1177 = vld [vmem:[%s2 + $0x10] sm:$0x1]
    %v1178 = vlaneseq
    %v1179 = vshrl.u32 %v1178, 7
    %v1180 = vsub.s32 0, %v1179
    %v1181 = vrot.slane %v1177, %v1180
    %v1186 = vunpack.c.l.b16 %v1172
    %v1187 = vunpack.c.l.b16 %v1173
    %v1188 = vunpack.c.l.b16 %v1174
    %v1189 = vunpack.c.l.b16 %v1175
    %v1190 = vpack.c.b16 %v1187, %v1186
    %v1191 = vpack.c.b16 %v1189, %v1188
    %v1195 = vsel %vm210, %v1176, 0
    %1197 = vmatprep.subr.bf16.mxu0 0
    %1198 = vmatpush1.bf16.msra.mxu0 %v1190
    %1199 = vmatprep.subr.bf16.mxu0 0
    %1200 = vmatpush1.bf16.msra.mxu0 %v1191
    %1201 = vmatprep.subr.bf16.mxu0 0
    %1202 = vmatpush1.bf16.msra.mxu0 0
    %1203 = vmatprep.subr.bf16.mxu0 0
    %1204 = vmatpush1.bf16.msra.mxu0 0
    %1205 = vmatprep.subr.bf16.mxu0 0
    %1206 = vmatpush1.bf16.msra.mxu0 0
    %1207 = vmatprep.subr.bf16.mxu0 0
    %1208 = vmatpush1.bf16.msra.mxu0 0
    %1209 = vmatprep.subr.bf16.mxu0 0
    %1210 = vmatpush1.bf16.msra.mxu0 0
    %1211 = vmatprep.subr.bf16.mxu0 0
    %1212 = vmatpush1.bf16.msra.mxu0 0
    %1213 = vmatprep.subr.bf16.mxu0 0
    %1214 = vmatpush1.bf16.msra.mxu0 0
    %1215 = vmatprep.subr.bf16.mxu0 0
    %1216 = vmatpush1.bf16.msra.mxu0 0
    %1217 = vmatprep.subr.bf16.mxu0 0
    %1218 = vmatpush1.bf16.msra.mxu0 0
    %1219 = vmatprep.subr.bf16.mxu0 0
    %1220 = vmatpush1.bf16.msra.mxu0 0
    %1221 = vmatprep.subr.bf16.mxu0 0
    %1222 = vmatpush1.bf16.msra.mxu0 0
    %1223 = vmatprep.subr.bf16.mxu0 0
    %1224 = vmatpush1.bf16.msra.mxu0 0
    %1225 = vmatprep.subr.bf16.mxu0 0
    %1226 = vmatpush1.bf16.msra.mxu0 0
    %1227 = vmatprep.subr.bf16.mxu0 0
    %1228 = vmatpush1.bf16.msra.mxu0 0
    %1229 = vmatprep.mubr.bf16.mxu0 0
    %1230 = vmatmul.mubr.bf16.gmra.mrb[0].mxu0 %v1195
    %v1231 = vpop.f32.mrb[0].mxu0
    %v1232 = vadd.f32 %v1181, %v1231
    %v1233 = vpop.f32.mrb[0].mxu0
    %v1234 = vpop.f32.mrb[0].mxu0
    %v1235 = vadd.f32 %v1181, %v1234
    %v1236 = vpop.f32.mrb[0].mxu0
    %1237 = vdwg.mxu0
    %v1238 = vmax.f32 %v1232, 0.0
    %v1239 = vmax.f32 %v1235, 0.0
    %v1240 = vld [vmem:[%s1 + $0x140] sm:$0xf]
    %v1241 = vld [vmem:[%s1 + $0x144] sm:$0xf]
    %v1242 = vld [vmem:[%s1 + $0x148] sm:$0xf]
    %v1243 = vld [vmem:[%s1 + $0x14c] sm:$0xf]
    %v1244 = vld [vmem:[%s1 + $0x150] sm:$0xf]
    %v1245 = vld [vmem:[%s1 + $0x154] sm:$0xf]
    %v1246 = vld [vmem:[%s1 + $0x158] sm:$0xf]
    %v1247 = vld [vmem:[%s1 + $0x15c] sm:$0xf]
    %v1248 = vpack.c.bf16 %v1239, %v1238
    %v1257 = vunpack.c.l.b16 %v1240
    %v1258 = vunpack.c.l.b16 %v1241
    %v1259 = vunpack.c.l.b16 %v1242
    %v1260 = vunpack.c.l.b16 %v1243
    %v1261 = vunpack.c.l.b16 %v1244
    %v1262 = vunpack.c.l.b16 %v1245
    %v1263 = vunpack.c.l.b16 %v1246
    %v1264 = vunpack.c.l.b16 %v1247
    %v1265 = vpack.c.b16 %v1258, %v1257
    %v1266 = vpack.c.b16 %v1260, %v1259
    %v1267 = vpack.c.b16 %v1262, %v1261
    %v1268 = vpack.c.b16 %v1264, %v1263
    %v1274 = vsel %vm552, %v1248, 0
    %1276 = vmatprep.subr.bf16.mxu0 0
    %1277 = vmatpush1.bf16.msra.mxu0 %v1265
    %1278 = vmatprep.subr.bf16.mxu0 0
    %1279 = vmatpush1.bf16.msra.mxu0 %v1266
    %1280 = vmatprep.subr.bf16.mxu0 0
    %1281 = vmatpush1.bf16.msra.mxu0 %v1267
    %1282 = vmatprep.subr.bf16.mxu0 0
    %1283 = vmatpush1.bf16.msra.mxu0 %v1268
    %1284 = vmatprep.subr.bf16.mxu0 0
    %1285 = vmatpush1.bf16.msra.mxu0 0
    %1286 = vmatprep.subr.bf16.mxu0 0
    %1287 = vmatpush1.bf16.msra.mxu0 0
    %1288 = vmatprep.subr.bf16.mxu0 0
    %1289 = vmatpush1.bf16.msra.mxu0 0
    %1290 = vmatprep.subr.bf16.mxu0 0
    %1291 = vmatpush1.bf16.msra.mxu0 0
    %1292 = vmatprep.subr.bf16.mxu0 0
    %1293 = vmatpush1.bf16.msra.mxu0 0
    %1294 = vmatprep.subr.bf16.mxu0 0
    %1295 = vmatpush1.bf16.msra.mxu0 0
    %1296 = vmatprep.subr.bf16.mxu0 0
    %1297 = vmatpush1.bf16.msra.mxu0 0
    %1298 = vmatprep.subr.bf16.mxu0 0
    %1299 = vmatpush1.bf16.msra.mxu0 0
    %1300 = vmatprep.subr.bf16.mxu0 0
    %1301 = vmatpush1.bf16.msra.mxu0 0
    %1302 = vmatprep.subr.bf16.mxu0 0
    %1303 = vmatpush1.bf16.msra.mxu0 0
    %1304 = vmatprep.subr.bf16.mxu0 0
    %1305 = vmatpush1.bf16.msra.mxu0 0
    %1306 = vmatprep.subr.bf16.mxu0 0
    %1307 = vmatpush1.bf16.msra.mxu0 0
    %1308 = vmatprep.mubr.bf16.mxu0 0
    %1309 = vmatmul.mubr.bf16.gmra.mrb[0].mxu0 %v1274
    %v1310 = vpop.f32.mrb[0].mxu0
    %v1311 = vadd.f32 0.0, %v1310
    %v1312 = vpop.f32.mrb[0].mxu0
    %v1313 = vpop.f32.mrb[0].mxu0
    %v1314 = vadd.f32 0.0, %v1313
    %v1315 = vpop.f32.mrb[0].mxu0
    %1316 = vdwg.mxu0
    %v1317 = vadd.f32 %v1130, %v1311
    %v1318 = vadd.f32 %v1131, %v1314
    %v1319 = vld [vmem:[%s2 + $0x11] sm:$0x1]
    %v1320 = vlaneseq
    %v1321 = vshrl.u32 %v1320, 7
    %v1322 = vsub.s32 0, %v1321
    %v1323 = vrot.slane %v1319, %v1322
    %v1324 = vadd.f32 %v1317, %v1323
    %v1325 = vadd.f32 %v1318, %v1323
    %v1326 = vld [vmem:[%s1 + $0x160] sm:$0xf]
    %v1327 = vld [vmem:[%s1 + $0x164] sm:$0xf]
    %v1328 = vld [vmem:[%s1 + $0x168] sm:$0xf]
    %v1329 = vld [vmem:[%s1 + $0x16c] sm:$0xf]
    %v1330 = vpack.c.bf16 %v1325, %v1324
    %v1331 = vld [vmem:[%s2 + $0x12] sm:$0x1]
    %v1332 = vlaneseq
    %v1333 = vshrl.u32 %v1332, 7
    %v1334 = vsub.s32 0, %v1333
    %v1335 = vrot.slane %v1331, %v1334
    %v1340 = vunpack.c.l.b16 %v1326
    %v1341 = vunpack.c.l.b16 %v1327
    %v1342 = vunpack.c.l.b16 %v1328
    %v1343 = vunpack.c.l.b16 %v1329
    %v1344 = vpack.c.b16 %v1341, %v1340
    %v1345 = vpack.c.b16 %v1343, %v1342
    %v1349 = vsel %vm210, %v1330, 0
    %1351 = vmatprep.subr.bf16.mxu0 0
    %1352 = vmatpush1.bf16.msra.mxu0 %v1344
    %1353 = vmatprep.subr.bf16.mxu0 0
    %1354 = vmatpush1.bf16.msra.mxu0 %v1345
    %1355 = vmatprep.subr.bf16.mxu0 0
    %1356 = vmatpush1.bf16.msra.mxu0 0
    %1357 = vmatprep.subr.bf16.mxu0 0
    %1358 = vmatpush1.bf16.msra.mxu0 0
    %1359 = vmatprep.subr.bf16.mxu0 0
    %1360 = vmatpush1.bf16.msra.mxu0 0
    %1361 = vmatprep.subr.bf16.mxu0 0
    %1362 = vmatpush1.bf16.msra.mxu0 0
    %1363 = vmatprep.subr.bf16.mxu0 0
    %1364 = vmatpush1.bf16.msra.mxu0 0
    %1365 = vmatprep.subr.bf16.mxu0 0
    %1366 = vmatpush1.bf16.msra.mxu0 0
    %1367 = vmatprep.subr.bf16.mxu0 0
    %1368 = vmatpush1.bf16.msra.mxu0 0
    %1369 = vmatprep.subr.bf16.mxu0 0
    %1370 = vmatpush1.bf16.msra.mxu0 0
    %1371 = vmatprep.subr.bf16.mxu0 0
    %1372 = vmatpush1.bf16.msra.mxu0 0
    %1373 = vmatprep.subr.bf16.mxu0 0
    %1374 = vmatpush1.bf16.msra.mxu0 0
    %1375 = vmatprep.subr.bf16.mxu0 0
    %1376 = vmatpush1.bf16.msra.mxu0 0
    %1377 = vmatprep.subr.bf16.mxu0 0
    %1378 = vmatpush1.bf16.msra.mxu0 0
    %1379 = vmatprep.subr.bf16.mxu0 0
    %1380 = vmatpush1.bf16.msra.mxu0 0
    %1381 = vmatprep.subr.bf16.mxu0 0
    %1382 = vmatpush1.bf16.msra.mxu0 0
    %1383 = vmatprep.mubr.bf16.mxu0 0
    %1384 = vmatmul.mubr.bf16.gmra.mrb[0].mxu0 %v1349
    %v1385 = vpop.f32.mrb[0].mxu0
    %v1386 = vadd.f32 %v1335, %v1385
    %v1387 = vpop.f32.mrb[0].mxu0
    %v1388 = vpop.f32.mrb[0].mxu0
    %v1389 = vadd.f32 %v1335, %v1388
    %v1390 = vpop.f32.mrb[0].mxu0
    %1391 = vdwg.mxu0
    %v1392 = vmax.f32 %v1386, 0.0
    %v1393 = vmax.f32 %v1389, 0.0
    %v1394 = vld [vmem:[%s1 + $0x170] sm:$0xf]
    %v1395 = vld [vmem:[%s1 + $0x174] sm:$0xf]
    %v1396 = vld [vmem:[%s1 + $0x178] sm:$0xf]
    %v1397 = vld [vmem:[%s1 + $0x17c] sm:$0xf]
    %v1398 = vpack.c.bf16 %v1393, %v1392
    %v1399 = vld [vmem:[%s2 + $0x13] sm:$0x1]
    %v1400 = vlaneseq
    %v1401 = vshrl.u32 %v1400, 7
    %v1402 = vsub.s32 0, %v1401
    %v1403 = vrot.slane %v1399, %v1402
    %v1408 = vunpack.c.l.b16 %v1394
    %v1409 = vunpack.c.l.b16 %v1395
    %v1410 = vunpack.c.l.b16 %v1396
    %v1411 = vunpack.c.l.b16 %v1397
    %v1412 = vpack.c.b16 %v1409, %v1408
    %v1413 = vpack.c.b16 %v1411, %v1410
    %v1417 = vsel %vm210, %v1398, 0
    %1419 = vmatprep.subr.bf16.mxu0 0
    %1420 = vmatpush1.bf16.msra.mxu0 %v1412
    %1421 = vmatprep.subr.bf16.mxu0 0
    %1422 = vmatpush1.bf16.msra.mxu0 %v1413
    %1423 = vmatprep.subr.bf16.mxu0 0
    %1424 = vmatpush1.bf16.msra.mxu0 0
    %1425 = vmatprep.subr.bf16.mxu0 0
    %1426 = vmatpush1.bf16.msra.mxu0 0
    %1427 = vmatprep.subr.bf16.mxu0 0
    %1428 = vmatpush1.bf16.msra.mxu0 0
    %1429 = vmatprep.subr.bf16.mxu0 0
    %1430 = vmatpush1.bf16.msra.mxu0 0
    %1431 = vmatprep.subr.bf16.mxu0 0
    %1432 = vmatpush1.bf16.msra.mxu0 0
    %1433 = vmatprep.subr.bf16.mxu0 0
    %1434 = vmatpush1.bf16.msra.mxu0 0
    %1435 = vmatprep.subr.bf16.mxu0 0
    %1436 = vmatpush1.bf16.msra.mxu0 0
    %1437 = vmatprep.subr.bf16.mxu0 0
    %1438 = vmatpush1.bf16.msra.mxu0 0
    %1439 = vmatprep.subr.bf16.mxu0 0
    %1440 = vmatpush1.bf16.msra.mxu0 0
    %1441 = vmatprep.subr.bf16.mxu0 0
    %1442 = vmatpush1.bf16.msra.mxu0 0
    %1443 = vmatprep.subr.bf16.mxu0 0
    %1444 = vmatpush1.bf16.msra.mxu0 0
    %1445 = vmatprep.subr.bf16.mxu0 0
    %1446 = vmatpush1.bf16.msra.mxu0 0
    %1447 = vmatprep.subr.bf16.mxu0 0
    %1448 = vmatpush1.bf16.msra.mxu0 0
    %1449 = vmatprep.subr.bf16.mxu0 0
    %1450 = vmatpush1.bf16.msra.mxu0 0
    %1451 = vmatprep.mubr.bf16.mxu0 0
    %1452 = vmatmul.mubr.bf16.gmra.mrb[0].mxu0 %v1417
    %v1453 = vpop.f32.mrb[0].mxu0
    %v1454 = vadd.f32 %v1403, %v1453
    %v1455 = vpop.f32.mrb[0].mxu0
    %v1456 = vpop.f32.mrb[0].mxu0
    %v1457 = vadd.f32 %v1403, %v1456
    %v1458 = vpop.f32.mrb[0].mxu0
    %1459 = vdwg.mxu0
    %1462 = vrot.lane.b32.xlu0 %v1454, 71
    %v1463 = vpop.permute.xlu0 %1462
    %1464 = vrot.lane.b32.xlu0 %v1457, 71
    %v1465 = vpop.permute.xlu0 %1464
    %v1468 = vsub.f32 %v16, %v1463
    %v1469 = vsub.f32 %v17, %v1465
    %1470 = vset.pattern.permute.xlu0 77
    %1471 = vperm.xlu0 %1470, %v16
    %v1472 = vpop.permute.xlu0 %1471
    %1474 = vset.pattern.permute.xlu0 77
    %1475 = vperm.xlu0 %1474, %v17
    %v1476 = vpop.permute.xlu0 %1475
    %v1478 = vmul.f32 %v1468, %v1472
    %v1479 = vmul.f32 %v1469, %v1476
    %v1480 = vmul.f32 %v1478, %v1478
    %v1481 = vmul.f32 %v1479, %v1479
    %1484 = vrot.lane.b32.xlu0 %v1480, 57
    %v1485 = vpop.permute.xlu0 %1484
    %1486 = vrot.lane.b32.xlu0 %v1481, 57
    %v1487 = vpop.permute.xlu0 %1486
    %v1490 = vsel %vm60, %v1485, 0.0
    %v1491 = vsel %vm60, %v1487, 0.0
    %v1492 = vadd.f32 %v1490, %v1491
    %1493 = vadd.xlane.f32.xlu0 %v1492
    %v1494 = vpop.xlane.xlu0 %1493
    %v1495 = vrot.slane %v1494, 4
    %v1496 = vadd.f32 %v1494, %v1495
    %v1497 = vrot.slane %v1496, 2
    %v1498 = vadd.f32 %v1496, %v1497
    %v1499 = vrot.slane %v1498, 1
    %v1500 = vadd.f32 %v1498, %v1499
    %s1501 = vtos %v1500
    %s1502 = smul.f32 %s1501, 0.015625
    %s1503 = scalar_lea.smem [#allocation2], 0
    %1504 = sst [smem:[%s1503]] %s1502
    // Predicated region
    $region14: #{_lambda_.1} parent=1 // pred_check
      _
    $region15: #{_lambda_.1} parent=1 // pred_check_branch
      %1506 = sbr.rel (0) target = $region17
    $region16: #{_lambda_.1} parent=1 // pred_region
      %s1508 = ssub.s32 16, 16
      %1509 = vsyncadd [#allocation3], %s1508
      %1512 = dma.smem_to_hbm [#allocation2], 16, %s3, [#allocation3]
    $region17: #{_lambda_.1} parent=1 // pred_fallthru
      _
    // Predicated region
    $region18: #{_lambda_.1} parent=1 // pred_check
      _
    $region19: #{_lambda_.1} parent=1 // pred_check_branch
      %1514 = sbr.rel (0) target = $region21
    $region20: #{_lambda_.1} parent=1 // pred_region
      %1515 = dma.done [#allocation3], 16
    $region21: #{_lambda_.1} parent=1 // pred_fallthru
      _
    %1516 = sfence
    %1517 = vsyncpa [#allocation3], 1

</llo_original>
